<compile_context>
chip_gen: v5e
topology: v5e:2x2
jax: 0.10.0
libtpu: 0.0.40
codegen_flags: <defaults>
</compile_context>

<pallas_src>
import functools

import jax
import jax.numpy as jnp
from jax import lax
from jax.experimental import pallas as pl
from jax.experimental.pallas import tpu as pltpu

_LANES = 128
_NEG_INF = -1e30


def _round_up(v, m=_LANES):
    return max(m, ((v + m - 1) // m) * m)


def _pad2(a, rows, cols):
    r, c = a.shape
    return jnp.pad(a, ((0, rows - r), (0, cols - c)))


# ----------------------------- fused kernel --------------------------------- #

def net_fused_kernel(betas_ref,                       # SMEM [num_layers] f32
                     x_ref, w1_ref, b1_ref,           # bf16
                     bias_ref,                        # bf16 additive mask [Np, Np]
                     w2_ref, b2_ref,                  # bf16
                     o_ref,                           # bf16 [Np, OUT_P]
                     *, num_layers, out_size):
    # ---- lin1 + ReLU (bf16 in, f32 acc) ----
    h = jnp.dot(x_ref[...], w1_ref[...], preferred_element_type=jnp.float32)
    h = jnp.maximum(h + b1_ref[...].astype(jnp.float32), 0.0)       # f32 [Np, HID_P]

    # ---- AGNNConv + ReLU layers (h, bias resident in VMEM across layers) ----
    for l in range(num_layers):
        beta = betas_ref[l]                                          # SMEM scalar
        ss = jnp.sum(h * h, axis=1, keepdims=True)
        hn = h * lax.rsqrt(jnp.maximum(ss, 1e-12))                   # row-normalized
        lhs = (hn * beta).astype(jnp.bfloat16)                       # fold beta (N*D mul)
        rhs = hn.astype(jnp.bfloat16)
        # s = beta * (hn @ hn.T) without an explicit transpose.
        # TODO(synk): confirm via pl.lower_as_mlir that the rhs-contracting
        # dot_general does not materialize a transposed VMEM copy before
        # scaling N up (at [128,128] a hidden vxpose is nearly free).
        s = lax.dot_general(lhs, rhs,
                            dimension_numbers=(((1,), (1,)), ((), ())),
                            preferred_element_type=jnp.float32)
        # masked + padded keys carry -1e30 -> exp underflows to exactly 0
        s = s + bias_ref[...].astype(jnp.float32)
        m = jnp.max(s, axis=1, keepdims=True)
        p = jnp.exp(s - m)
        denom = jnp.maximum(jnp.sum(p, axis=1, keepdims=True), 1e-12)
        att = p * pl.reciprocal(denom, approx=True)                  # row-stochastic
        h = jnp.dot(att.astype(jnp.bfloat16), h.astype(jnp.bfloat16),
                    preferred_element_type=jnp.float32)
        h = jnp.maximum(h, 0.0)

    # ---- lin2 + log_softmax over the real out_size lanes ----
    y = jnp.dot(h.astype(jnp.bfloat16), w2_ref[...],
                preferred_element_type=jnp.float32)
    y = y + b2_ref[...].astype(jnp.float32)
    col = lax.broadcasted_iota(jnp.int32, y.shape, 1)
    y = jnp.where(col < out_size, y, jnp.float32(_NEG_INF))          # mask padded lanes
    m = jnp.max(y, axis=1, keepdims=True)
    z = y - m
    lse = jnp.log(jnp.sum(jnp.exp(z), axis=1, keepdims=True))
    o_ref[...] = (z - lse).astype(o_ref.dtype)


# ----------------------------- one-time preparation -------------------------- #

def prepare_params(params):
    """Pad/cast weights to lane-dense bf16 ONCE, outside the forward path."""
    in_size, hid_size = params["w1_t"].shape
    out_size = params["w2_t"].shape[1]
    in_p, hid_p, out_p = _round_up(in_size), _round_up(hid_size), _round_up(out_size)
    return {
        "w1_t": _pad2(jnp.asarray(params["w1_t"], jnp.float32).astype(jnp.bfloat16), in_p, hid_p),
        "b1": _pad2(jnp.asarray(params["b1"], jnp.float32).astype(jnp.bfloat16), 1, hid_p),
        "w2_t": _pad2(jnp.asarray(params["w2_t"], jnp.float32).astype(jnp.bfloat16), hid_p, out_p),
        "b2": _pad2(jnp.asarray(params["b2"], jnp.float32).astype(jnp.bfloat16), 1, out_p),
        "betas": jnp.asarray(params["betas"], jnp.float32).reshape(-1),
    }


def prepare_graph(x, adj):
    """Pad node features (rows -> multiple of 128) and precompute the additive
    attention bias: 0 for edges, -1e30 for non-edges and padded keys."""
    n, in_size = x.shape
    n_p, in_p = _round_up(n), _round_up(in_size)
    x_p = _pad2(jnp.asarray(x, jnp.float32).astype(jnp.bfloat16), n_p, in_p)
    adj_p = _pad2(jnp.asarray(adj, jnp.float32), n_p, n_p)           # pad region = 0 (no edge)
    bias_p = jnp.where(adj_p > 0, jnp.float32(0.0),
                       jnp.float32(_NEG_INF)).astype(jnp.bfloat16)
    return x_p, bias_p


# ----------------------------- forward wrapper ------------------------------- #

@functools.partial(jax.jit, static_argnames=("num_layers", "n_nodes", "out_size"))
def net_forward(x_p, bias_p, pp, *, num_layers, n_nodes, out_size):
    """Pallas equivalent of Net.forward: one fused kernel call + final slice."""
    n_p, in_p = x_p.shape
    hid_p = pp["w1_t"].shape[1]
    out_p = pp["w2_t"].shape[1]

    kernel = functools.partial(net_fused_kernel,
                               num_layers=num_layers, out_size=out_size)

    # advisory cost for XLA scheduling around this small custom call
    flops = (2 * n_p * in_p * hid_p
             + num_layers * 2 * (2 * n_p * n_p * hid_p)
             + 2 * n_p * hid_p * out_p)
    transcendentals = num_layers * (n_p * n_p + 2 * n_p) + n_p * out_p
    bytes_accessed = 2 * (n_p * in_p + in_p * hid_p + hid_p + n_p * n_p
                          + hid_p * out_p + out_p + n_p * out_p)

    out_full = pl.pallas_call(
        kernel,
        out_shape=jax.ShapeDtypeStruct((n_p, out_p), jnp.bfloat16),
        grid_spec=pltpu.PrefetchScalarGridSpec(
            num_scalar_prefetch=1,                    # betas -> SMEM
            grid=(1,),
            in_specs=[
                pl.BlockSpec((n_p, in_p), lambda i, b: (0, 0)),
                pl.BlockSpec((in_p, hid_p), lambda i, b: (0, 0)),
                pl.BlockSpec((1, hid_p), lambda i, b: (0, 0)),
                pl.BlockSpec((n_p, n_p), lambda i, b: (0, 0)),
                pl.BlockSpec((hid_p, out_p), lambda i, b: (0, 0)),
                pl.BlockSpec((1, out_p), lambda i, b: (0, 0)),
            ],
            out_specs=pl.BlockSpec((n_p, out_p), lambda i, b: (0, 0)),
        ),
        compiler_params=pltpu.CompilerParams(
            dimension_semantics=("arbitrary",),
            # default scoped VMEM limit (16/32 MiB) is ample for these blocks
        ),
        cost_estimate=pl.CostEstimate(flops=flops,
                                      transcendentals=transcendentals,
                                      bytes_accessed=bytes_accessed),
    )(pp["betas"], x_p, pp["w1_t"], pp["b1"], bias_p, pp["w2_t"], pp["b2"])

    return out_full[:n_nodes, :out_size]


# ----------------------------- setup / main ---------------------------------- #

def init_params(key, in_size, hid_size, out_size, num_layers):
    k1, k2, k3, k4 = jax.random.split(key, 4)
    lim1 = 1.0 / (in_size ** 0.5)
    lim2 = 1.0 / (hid_size ** 0.5)
    # PyTorch Linear stores W as [out, in]; keep pre-transposed [in, out].
    w1_t = jax.random.uniform(k1, (in_size, hid_size), jnp.float32, -lim1, lim1)
    b1 = jax.random.uniform(k2, (1, hid_size), jnp.float32, -lim1, lim1)
    w2_t = jax.random.uniform(k3, (hid_size, out_size), jnp.float32, -lim2, lim2)
    b2 = jax.random.uniform(k4, (1, out_size), jnp.float32, -lim2, lim2)
    # AGNNConv: one learnable scalar beta per layer, init 1.0
    betas = [1.0 for _ in range(num_layers)]
    return {"w1_t": w1_t, "b1": b1, "w2_t": w2_t, "b2": b2, "betas": betas}


if __name__ == "__main__":
    key = jax.random.PRNGKey(0)
    k_x, k_adj, k_p = jax.random.split(key, 3)

    N = 64             # number of graph nodes
    in_size = 32
    hid_size = 32
    out_size = 16
    num_layers = 2

    # node features (reference used .half(); bf16 is the TPU analogue)
    x = jax.random.normal(k_x, (N, in_size), jnp.float32)

    # random symmetric adjacency with self-loops (dense stand-in for inputInfo's graph)
    a = jax.random.bernoulli(k_adj, 0.2, (N, N))
    adj = jnp.logical_or(a, a.T)
    adj = jnp.logical_or(adj, jnp.eye(N, dtype=bool))

    raw_params = init_params(k_p, in_size, hid_size, out_size, num_layers)

    # one-time prep (outside the forward path): pad/cast weights, pad features,
    # precompute the additive attention bias
    pp = prepare_params(raw_params)
    x_p, bias_p = prepare_graph(x, adj)

    out = net_forward(x_p, bias_p, pp,
                      num_layers=num_layers, n_nodes=N, out_size=out_size)
    out = jax.block_until_ready(out)

    assert out.shape == (N, out_size) and out.dtype == jnp.bfloat16
    out_f32 = out.astype(jnp.float32)
    assert bool(jnp.all(jnp.isfinite(out_f32)))
    # rows of log_softmax should (approximately, bf16 storage) exponentiate-sum to 1
    row_sums = jnp.sum(jnp.exp(out_f32), axis=1)
    assert bool(jnp.all(jnp.abs(row_sums - 1.0) < 5e-2))

    print("KERNEL_OK")
</pallas_src>

<mosaic_0001>
module attributes {stable_mosaic.version = 11 : i64} {
  func.func @net_fused_kernel(%arg0: i32, %arg1: memref<2xf32, #tpu.memory_space<smem>>, %arg2: memref<128x128xbf16, #tpu.memory_space<vmem>>, %arg3: memref<128x128xbf16, #tpu.memory_space<vmem>>, %arg4: memref<1x128xbf16, #tpu.memory_space<vmem>>, %arg5: memref<128x128xbf16, #tpu.memory_space<vmem>>, %arg6: memref<128x128xbf16, #tpu.memory_space<vmem>>, %arg7: memref<1x128xbf16, #tpu.memory_space<vmem>>, %arg8: memref<128x128xbf16, #tpu.memory_space<vmem>>) attributes {dimension_semantics = [#tpu.dimension_semantics<arbitrary>], iteration_bounds = array<i64: 1>, scalar_prefetch = 1 : i64, scratch_operands = 0 : i64, tpu.core_type = #tpu.core_type<tc>, window_params = [{pipeline_mode = #tpu.pipeline_mode<synchronous>, transform_indices = @transform_0, window_bounds = array<i64: 128, 128>}, {pipeline_mode = #tpu.pipeline_mode<synchronous>, transform_indices = @transform_1, window_bounds = array<i64: 128, 128>}, {pipeline_mode = #tpu.pipeline_mode<synchronous>, transform_indices = @transform_2, window_bounds = array<i64: 1, 128>}, {pipeline_mode = #tpu.pipeline_mode<synchronous>, transform_indices = @transform_3, window_bounds = array<i64: 128, 128>}, {pipeline_mode = #tpu.pipeline_mode<synchronous>, transform_indices = @transform_4, window_bounds = array<i64: 128, 128>}, {pipeline_mode = #tpu.pipeline_mode<synchronous>, transform_indices = @transform_5, window_bounds = array<i64: 1, 128>}, {pipeline_mode = #tpu.pipeline_mode<synchronous>, transform_indices = @transform_6, window_bounds = array<i64: 128, 128>}]} {
    %c0 = arith.constant 0 : index
    %c0_0 = arith.constant 0 : index
    %0 = vector.load %arg2[%c0, %c0_0] : memref<128x128xbf16, #tpu.memory_space<vmem>>, vector<128x128xbf16>
    %c0_1 = arith.constant 0 : index
    %c0_2 = arith.constant 0 : index
    %1 = vector.load %arg3[%c0_1, %c0_2] : memref<128x128xbf16, #tpu.memory_space<vmem>>, vector<128x128xbf16>
    %cst = arith.constant dense<0.000000e+00> : vector<128x128xf32>
    %2 = tpu.matmul %0, %1, %cst {dimension_numbers = #tpu.dot_dimension_numbers<[1], [0], [0], [1], [0, 0, 1, 1], [], []>} : vector<128x128xbf16>, vector<128x128xbf16>, vector<128x128xf32> -> vector<128x128xf32>
    %c0_3 = arith.constant 0 : index
    %c0_4 = arith.constant 0 : index
    %3 = vector.load %arg4[%c0_3, %c0_4] : memref<1x128xbf16, #tpu.memory_space<vmem>>, vector<1x128xbf16>
    %4 = arith.extf %3 : vector<1x128xbf16> to vector<1x128xf32>
    %5 = vector.broadcast %4 : vector<1x128xf32> to vector<128x128xf32>
    %6 = arith.addf %2, %5 : vector<128x128xf32>
    %cst_5 = arith.constant 0.000000e+00 : f32
    %7 = vector.broadcast %cst_5 : f32 to vector<128x128xf32>
    %8 = arith.maximumf %6, %7 : vector<128x128xf32>
    %c0_6 = arith.constant 0 : index
    %9 = memref.load %arg1[%c0_6] : memref<2xf32, #tpu.memory_space<smem>>
    %10 = arith.mulf %8, %8 : vector<128x128xf32>
    %cst_7 = arith.constant dense<0.000000e+00> : vector<128xf32>
    %11 = vector.multi_reduction <add>, %10, %cst_7 [1] : vector<128x128xf32> to vector<128xf32>
    %12 = vector.shape_cast %11 : vector<128xf32> to vector<128x1xf32>
    %cst_8 = arith.constant 9.99999996E-13 : f32
    %13 = vector.broadcast %cst_8 : f32 to vector<128x1xf32>
    %14 = arith.maximumf %12, %13 : vector<128x1xf32>
    %15 = math.rsqrt %14 : vector<128x1xf32>
    %16 = vector.broadcast %15 : vector<128x1xf32> to vector<128x128xf32>
    %17 = arith.mulf %8, %16 : vector<128x128xf32>
    %18 = vector.broadcast %9 : f32 to vector<128x128xf32>
    %19 = arith.mulf %17, %18 : vector<128x128xf32>
    %20 = arith.truncf %19 : vector<128x128xf32> to vector<128x128xbf16>
    %21 = arith.truncf %17 : vector<128x128xf32> to vector<128x128xbf16>
    %cst_9 = arith.constant dense<0.000000e+00> : vector<128x128xf32>
    %22 = tpu.matmul %20, %21, %cst_9 {dimension_numbers = #tpu.dot_dimension_numbers<[1], [1], [0], [0], [0, 0, 1, 0], [], []>} : vector<128x128xbf16>, vector<128x128xbf16>, vector<128x128xf32> -> vector<128x128xf32>
    %c0_10 = arith.constant 0 : index
    %c0_11 = arith.constant 0 : index
    %23 = vector.load %arg5[%c0_10, %c0_11] : memref<128x128xbf16, #tpu.memory_space<vmem>>, vector<128x128xbf16>
    %24 = arith.extf %23 : vector<128x128xbf16> to vector<128x128xf32>
    %25 = arith.addf %22, %24 : vector<128x128xf32>
    %cst_12 = arith.constant dense<0xFF800000> : vector<128xf32>
    %26 = vector.multi_reduction <maximumf>, %25, %cst_12 [1] : vector<128x128xf32> to vector<128xf32>
    %27 = vector.shape_cast %26 : vector<128xf32> to vector<128x1xf32>
    %28 = vector.broadcast %27 : vector<128x1xf32> to vector<128x128xf32>
    %29 = arith.subf %25, %28 : vector<128x128xf32>
    %30 = math.exp %29 : vector<128x128xf32>
    %cst_13 = arith.constant dense<0.000000e+00> : vector<128xf32>
    %31 = vector.multi_reduction <add>, %30, %cst_13 [1] : vector<128x128xf32> to vector<128xf32>
    %32 = vector.shape_cast %31 : vector<128xf32> to vector<128x1xf32>
    %cst_14 = arith.constant 9.99999996E-13 : f32
    %33 = vector.broadcast %cst_14 : f32 to vector<128x1xf32>
    %34 = arith.maximumf %32, %33 : vector<128x1xf32>
    %35 = tpu.reciprocal %34 {approx = true} : vector<128x1xf32> -> vector<128x1xf32>
    %36 = vector.broadcast %35 : vector<128x1xf32> to vector<128x128xf32>
    %37 = arith.mulf %30, %36 : vector<128x128xf32>
    %38 = arith.truncf %37 : vector<128x128xf32> to vector<128x128xbf16>
    %39 = arith.truncf %8 : vector<128x128xf32> to vector<128x128xbf16>
    %cst_15 = arith.constant dense<0.000000e+00> : vector<128x128xf32>
    %40 = tpu.matmul %38, %39, %cst_15 {dimension_numbers = #tpu.dot_dimension_numbers<[1], [0], [0], [1], [0, 0, 1, 1], [], []>} : vector<128x128xbf16>, vector<128x128xbf16>, vector<128x128xf32> -> vector<128x128xf32>
    %cst_16 = arith.constant 0.000000e+00 : f32
    %41 = vector.broadcast %cst_16 : f32 to vector<128x128xf32>
    %42 = arith.maximumf %40, %41 : vector<128x128xf32>
    %c1 = arith.constant 1 : index
    %43 = memref.load %arg1[%c1] : memref<2xf32, #tpu.memory_space<smem>>
    %44 = arith.mulf %42, %42 : vector<128x128xf32>
    %cst_17 = arith.constant dense<0.000000e+00> : vector<128xf32>
    %45 = vector.multi_reduction <add>, %44, %cst_17 [1] : vector<128x128xf32> to vector<128xf32>
    %46 = vector.shape_cast %45 : vector<128xf32> to vector<128x1xf32>
    %cst_18 = arith.constant 9.99999996E-13 : f32
    %47 = vector.broadcast %cst_18 : f32 to vector<128x1xf32>
    %48 = arith.maximumf %46, %47 : vector<128x1xf32>
    %49 = math.rsqrt %48 : vector<128x1xf32>
    %50 = vector.broadcast %49 : vector<128x1xf32> to vector<128x128xf32>
    %51 = arith.mulf %42, %50 : vector<128x128xf32>
    %52 = vector.broadcast %43 : f32 to vector<128x128xf32>
    %53 = arith.mulf %51, %52 : vector<128x128xf32>
    %54 = arith.truncf %53 : vector<128x128xf32> to vector<128x128xbf16>
    %55 = arith.truncf %51 : vector<128x128xf32> to vector<128x128xbf16>
    %cst_19 = arith.constant dense<0.000000e+00> : vector<128x128xf32>
    %56 = tpu.matmul %54, %55, %cst_19 {dimension_numbers = #tpu.dot_dimension_numbers<[1], [1], [0], [0], [0, 0, 1, 0], [], []>} : vector<128x128xbf16>, vector<128x128xbf16>, vector<128x128xf32> -> vector<128x128xf32>
    %c0_20 = arith.constant 0 : index
    %c0_21 = arith.constant 0 : index
    %57 = vector.load %arg5[%c0_20, %c0_21] : memref<128x128xbf16, #tpu.memory_space<vmem>>, vector<128x128xbf16>
    %58 = arith.extf %57 : vector<128x128xbf16> to vector<128x128xf32>
    %59 = arith.addf %56, %58 : vector<128x128xf32>
    %cst_22 = arith.constant dense<0xFF800000> : vector<128xf32>
    %60 = vector.multi_reduction <maximumf>, %59, %cst_22 [1] : vector<128x128xf32> to vector<128xf32>
    %61 = vector.shape_cast %60 : vector<128xf32> to vector<128x1xf32>
    %62 = vector.broadcast %61 : vector<128x1xf32> to vector<128x128xf32>
    %63 = arith.subf %59, %62 : vector<128x128xf32>
    %64 = math.exp %63 : vector<128x128xf32>
    %cst_23 = arith.constant dense<0.000000e+00> : vector<128xf32>
    %65 = vector.multi_reduction <add>, %64, %cst_23 [1] : vector<128x128xf32> to vector<128xf32>
    %66 = vector.shape_cast %65 : vector<128xf32> to vector<128x1xf32>
    %cst_24 = arith.constant 9.99999996E-13 : f32
    %67 = vector.broadcast %cst_24 : f32 to vector<128x1xf32>
    %68 = arith.maximumf %66, %67 : vector<128x1xf32>
    %69 = tpu.reciprocal %68 {approx = true} : vector<128x1xf32> -> vector<128x1xf32>
    %70 = vector.broadcast %69 : vector<128x1xf32> to vector<128x128xf32>
    %71 = arith.mulf %64, %70 : vector<128x128xf32>
    %72 = arith.truncf %71 : vector<128x128xf32> to vector<128x128xbf16>
    %73 = arith.truncf %42 : vector<128x128xf32> to vector<128x128xbf16>
    %cst_25 = arith.constant dense<0.000000e+00> : vector<128x128xf32>
    %74 = tpu.matmul %72, %73, %cst_25 {dimension_numbers = #tpu.dot_dimension_numbers<[1], [0], [0], [1], [0, 0, 1, 1], [], []>} : vector<128x128xbf16>, vector<128x128xbf16>, vector<128x128xf32> -> vector<128x128xf32>
    %cst_26 = arith.constant 0.000000e+00 : f32
    %75 = vector.broadcast %cst_26 : f32 to vector<128x128xf32>
    %76 = arith.maximumf %74, %75 : vector<128x128xf32>
    %77 = arith.truncf %76 : vector<128x128xf32> to vector<128x128xbf16>
    %c0_27 = arith.constant 0 : index
    %c0_28 = arith.constant 0 : index
    %78 = vector.load %arg6[%c0_27, %c0_28] : memref<128x128xbf16, #tpu.memory_space<vmem>>, vector<128x128xbf16>
    %cst_29 = arith.constant dense<0.000000e+00> : vector<128x128xf32>
    %79 = tpu.matmul %77, %78, %cst_29 {dimension_numbers = #tpu.dot_dimension_numbers<[1], [0], [0], [1], [0, 0, 1, 1], [], []>} : vector<128x128xbf16>, vector<128x128xbf16>, vector<128x128xf32> -> vector<128x128xf32>
    %c0_30 = arith.constant 0 : index
    %c0_31 = arith.constant 0 : index
    %80 = vector.load %arg7[%c0_30, %c0_31] : memref<1x128xbf16, #tpu.memory_space<vmem>>, vector<1x128xbf16>
    %81 = arith.extf %80 : vector<1x128xbf16> to vector<1x128xf32>
    %82 = vector.broadcast %81 : vector<1x128xf32> to vector<128x128xf32>
    %83 = arith.addf %79, %82 : vector<128x128xf32>
    %84 = tpu.iota {dimensions = array<i32: 1>} : vector<128x128xi32>
    %c16_i32 = arith.constant 16 : i32
    %85 = vector.broadcast %c16_i32 : i32 to vector<128x128xi32>
    %86 = arith.cmpi slt, %84, %85 : vector<128x128xi32>
    %cst_32 = arith.constant -1.000000e+30 : f32
    %87 = vector.broadcast %cst_32 : f32 to vector<128x128xf32>
    %88 = arith.select %86, %83, %87 : vector<128x128xi1>, vector<128x128xf32>
    %cst_33 = arith.constant dense<0xFF800000> : vector<128xf32>
    %89 = vector.multi_reduction <maximumf>, %88, %cst_33 [1] : vector<128x128xf32> to vector<128xf32>
    %90 = vector.shape_cast %89 : vector<128xf32> to vector<128x1xf32>
    %91 = vector.broadcast %90 : vector<128x1xf32> to vector<128x128xf32>
    %92 = arith.subf %88, %91 : vector<128x128xf32>
    %93 = math.exp %92 : vector<128x128xf32>
    %cst_34 = arith.constant dense<0.000000e+00> : vector<128xf32>
    %94 = vector.multi_reduction <add>, %93, %cst_34 [1] : vector<128x128xf32> to vector<128xf32>
    %95 = vector.shape_cast %94 : vector<128xf32> to vector<128x1xf32>
    %96 = math.log %95 : vector<128x1xf32>
    %97 = vector.broadcast %96 : vector<128x1xf32> to vector<128x128xf32>
    %98 = arith.subf %92, %97 : vector<128x128xf32>
    %99 = arith.truncf %98 : vector<128x128xf32> to vector<128x128xbf16>
    %c0_35 = arith.constant 0 : index
    %c0_36 = arith.constant 0 : index
    %100 = vector.load %arg8[%c0_35, %c0_36] : memref<128x128xbf16, #tpu.memory_space<vmem>>, vector<128x128xbf16>
    tpu.vector_store %arg8[%c0_35, %c0_36], %99 {strides = array<i32>} : memref<128x128xbf16, #tpu.memory_space<vmem>>, vector<128x128xbf16>,
    return
  }
  func.func @transform_0(%arg0: i32, %arg1: memref<2xf32, #tpu.memory_space<smem>>) -> (i32, i32) {
    %c0_i32 = arith.constant 0 : i32
    %c0_i32_0 = arith.constant 0 : i32
    %c0_i32_1 = arith.constant 0 : i32
    return %c0_i32, %c0_i32_0 : i32, i32
  }
  func.func @transform_1(%arg0: i32, %arg1: memref<2xf32, #tpu.memory_space<smem>>) -> (i32, i32) {
    %c0_i32 = arith.constant 0 : i32
    %c0_i32_0 = arith.constant 0 : i32
    %c0_i32_1 = arith.constant 0 : i32
    return %c0_i32, %c0_i32_0 : i32, i32
  }
  func.func @transform_2(%arg0: i32, %arg1: memref<2xf32, #tpu.memory_space<smem>>) -> (i32, i32) {
    %c0_i32 = arith.constant 0 : i32
    %c0_i32_0 = arith.constant 0 : i32
    %c0_i32_1 = arith.constant 0 : i32
    return %c0_i32, %c0_i32_0 : i32, i32
  }
  func.func @transform_3(%arg0: i32, %arg1: memref<2xf32, #tpu.memory_space<smem>>) -> (i32, i32) {
    %c0_i32 = arith.constant 0 : i32
    %c0_i32_0 = arith.constant 0 : i32
    %c0_i32_1 = arith.constant 0 : i32
    return %c0_i32, %c0_i32_0 : i32, i32
  }
  func.func @transform_4(%arg0: i32, %arg1: memref<2xf32, #tpu.memory_space<smem>>) -> (i32, i32) {
    %c0_i32 = arith.constant 0 : i32
    %c0_i32_0 = arith.constant 0 : i32
    %c0_i32_1 = arith.constant 0 : i32
    return %c0_i32, %c0_i32_0 : i32, i32
  }
  func.func @transform_5(%arg0: i32, %arg1: memref<2xf32, #tpu.memory_space<smem>>) -> (i32, i32) {
    %c0_i32 = arith.constant 0 : i32
    %c0_i32_0 = arith.constant 0 : i32
    %c0_i32_1 = arith.constant 0 : i32
    return %c0_i32, %c0_i32_0 : i32, i32
  }
  func.func @transform_6(%arg0: i32, %arg1: memref<2xf32, #tpu.memory_space<smem>>) -> (i32, i32) {
    %c0_i32 = arith.constant 0 : i32
    %c0_i32_0 = arith.constant 0 : i32
    %c0_i32_1 = arith.constant 0 : i32
    return %c0_i32, %c0_i32_0 : i32, i32
  }
}

</mosaic_0001>

<llo_original>
// kernel: net_forward.1
$region0: #{net_forward.1}
  #allocation0 [shape = 'u32[]', space=smem, size = 0x4, offset = 0x4, fixed_abs, tag = 'smem constant byte address 0x4 - core index']
  #allocation1 [shape = 'u32[72,128]{1,0:T(1,128)}', space=vmem, size = 0x9000, scoped, tag = 'internal scratch']
  #allocation2 [shape = 's32[1]{0}', space=sflag, size = 0x4, scoped, tag = 'scoped memory for net_forward.1']
  #allocation3 [shape = 'u8[512]{0}', space=smem, size = 0x200, scoped, tag = 'prefetched SMEM operand 0']
  %s0 = inlined_call_operand.vmem [shape: f32[2], index: 0, kind: input, shape index: {}]
  %s1 = inlined_call_operand.hbm [shape: bf16[128,128], index: 1, kind: input, shape index: {}]
  %s2 = inlined_call_operand.hbm [shape: bf16[128,128], index: 2, kind: input, shape index: {}]
  %s3 = inlined_call_operand.hbm [shape: bf16[1,128], index: 3, kind: input, shape index: {}]
  %s4 = inlined_call_operand.hbm [shape: bf16[128,128], index: 4, kind: input, shape index: {}]
  %s5 = inlined_call_operand.hbm [shape: bf16[128,128], index: 5, kind: input, shape index: {}]
  %s6 = inlined_call_operand.vmem [shape: bf16[1,128], index: 6, kind: input, shape index: {}]
  %s7 = inlined_call_operand.vmem [shape: bf16[128,128], index: 7, kind: output, shape index: {}]
  %s8 = sld [smem:[#allocation0]]
  $region54: #{net_forward.1} parent=0
    _
  %s10 = ssub.s32 1, %s8
  %s11 = scalar_select 0, %s10, %s8
  %s13 = sshll.u32 %s0, 4
  %s14 = int_to_ptr.vmem [resolvable:$true] %s13
  %16 = dma.vmem_to_smem %s14, 16, [#allocation3], [#allocation2]
  %18 = dma.done [#allocation2], 16
  %19 = sfence
  $region1: #{net_forward.1} parent=0
    #allocation4 [shape = 'u8[32768]{0}', space=vmem, size = 0x8000, scoped, tag = 'input window, operand 1, single buffered']
    #allocation5 [shape = 's32[1]{0}', space=sflag, size = 0x4, scoped, tag = 'scoped memory for net_forward.1']
    #allocation6 [shape = 'u8[32768]{0}', space=vmem, size = 0x8000, scoped, tag = 'input window, operand 2, single buffered']
    #allocation7 [shape = 's32[1]{0}', space=sflag, size = 0x4, scoped, tag = 'scoped memory for net_forward.1']
    #allocation8 [shape = 'u8[512]{0}', space=vmem, size = 0x400, scoped, tag = 'input window, operand 3, single buffered']
    #allocation9 [shape = 'u8[32768]{0}', space=vmem, size = 0x8000, scoped, tag = 'input window, operand 4, single buffered']
    #allocation10 [shape = 's32[1]{0}', space=sflag, size = 0x4, scoped, tag = 'scoped memory for net_forward.1']
    #allocation11 [shape = 'u8[32768]{0}', space=vmem, size = 0x8000, scoped, tag = 'input window, operand 5, single buffered']
    %20 = vsyncpa [#allocation5], 0
    %21 = vsyncpa [#allocation7], 0
    %22 = vsyncpa [#allocation10], 0
    // Predicated region
    $region2: #{net_forward.1} parent=1 // pred_check
      _
    $region3: #{net_forward.1} parent=1 // pred_check_branch
      %24 = sbr.rel (0) target = $region5
    $region4: #{net_forward.1} parent=1 // pred_region
      %26 = vsyncadd [#allocation5], 0
      %s27 = sshll.u32 %s1, 4
      %s28 = int_to_ptr.hbm [resolvable:$true] %s27
      %s29 = sshll.u32 [#allocation4], 4
      %s30 = int_to_ptr.vmem [resolvable:$true] %s29
      %35 = dma.hbm_to_vmem [thread:$0]  %s28, 1024, %s30, [#allocation5], 64, 64, 4
    $region5: #{net_forward.1} parent=1 // pred_fallthru
      _
    // Predicated region
    $region6: #{net_forward.1} parent=1 // pred_check
      _
    $region7: #{net_forward.1} parent=1 // pred_check_branch
      %37 = sbr.rel (0) target = $region9
    $region8: #{net_forward.1} parent=1 // pred_region
      %39 = vsyncadd [#allocation7], 0
      %s40 = sshll.u32 %s2, 4
      %s41 = int_to_ptr.hbm [resolvable:$true] %s40
      %s42 = sshll.u32 [#allocation6], 4
      %s43 = int_to_ptr.vmem [resolvable:$true] %s42
      %48 = dma.hbm_to_vmem [thread:$0]  %s41, 1024, %s43, [#allocation7], 64, 64, 4
    $region9: #{net_forward.1} parent=1 // pred_fallthru
      _
    // Predicated region
    $region10: #{net_forward.1} parent=1 // pred_check
      _
    $region11: #{net_forward.1} parent=1 // pred_check_branch
      %50 = sbr.rel (0) target = $region13
    $region12: #{net_forward.1} parent=1 // pred_region
      %52 = vsyncadd [#allocation7], 0
      %s54 = sshll.u32 %s3, 4
      %s55 = int_to_ptr.hbm [resolvable:$true] %s54
      %s56 = sshll.u32 [#allocation8], 4
      %s57 = int_to_ptr.vmem [resolvable:$true] %s56
      %59 = dma.hbm_to_vmem [thread:$0]  %s55, 16, %s57, [#allocation7]
    $region13: #{net_forward.1} parent=1 // pred_fallthru
      _
    // Predicated region
    $region14: #{net_forward.1} parent=1 // pred_check
      _
    $region15: #{net_forward.1} parent=1 // pred_check_branch
      %61 = sbr.rel (0) target = $region17
    $region16: #{net_forward.1} parent=1 // pred_region
      %63 = vsyncadd [#allocation10], 0
      %s64 = sshll.u32 %s4, 4
      %s65 = int_to_ptr.hbm [resolvable:$true] %s64
      %s66 = sshll.u32 [#allocation9], 4
      %s67 = int_to_ptr.vmem [resolvable:$true] %s66
      %72 = dma.hbm_to_vmem [thread:$0]  %s65, 1024, %s67, [#allocation10], 64, 64, 4
    $region17: #{net_forward.1} parent=1 // pred_fallthru
      _
    // Predicated region
    $region18: #{net_forward.1} parent=1 // pred_check
      _
    $region19: #{net_forward.1} parent=1 // pred_check_branch
      %74 = sbr.rel (0) target = $region21
    $region20: #{net_forward.1} parent=1 // pred_region
      %76 = vsyncadd [#allocation10], 0
      %s77 = sshll.u32 %s5, 4
      %s78 = int_to_ptr.hbm [resolvable:$true] %s77
      %s79 = sshll.u32 [#allocation11], 4
      %s80 = int_to_ptr.vmem [resolvable:$true] %s79
      %85 = dma.hbm_to_vmem [thread:$0]  %s78, 1024, %s80, [#allocation10], 64, 64, 4
    $region21: #{net_forward.1} parent=1 // pred_fallthru
      _
    // Predicated region
    $region22: #{net_forward.1} parent=1 // pred_check
      _
    $region23: #{net_forward.1} parent=1 // pred_check_branch
      %87 = sbr.rel (0) target = $region25
    $region24: #{net_forward.1} parent=1 // pred_region
      _
    $region25: #{net_forward.1} parent=1 // pred_fallthru
      _
    // Predicated region
    $region26: #{net_forward.1} parent=1 // pred_check
      _
    $region27: #{net_forward.1} parent=1 // pred_check_branch
      %89 = sbr.rel (0) target = $region29
    $region28: #{net_forward.1} parent=1 // pred_region
      %91 = dma.done [#allocation5], 1024
    $region29: #{net_forward.1} parent=1 // pred_fallthru
      _
    // Predicated region
    $region30: #{net_forward.1} parent=1 // pred_check
      _
    $region31: #{net_forward.1} parent=1 // pred_check_branch
      %93 = sbr.rel (0) target = $region33
    $region32: #{net_forward.1} parent=1 // pred_region
      %95 = dma.done [#allocation7], 1024
    $region33: #{net_forward.1} parent=1 // pred_fallthru
      _
    // Predicated region
    $region34: #{net_forward.1} parent=1 // pred_check
      _
    $region35: #{net_forward.1} parent=1 // pred_check_branch
      %97 = sbr.rel (0) target = $region37
    $region36: #{net_forward.1} parent=1 // pred_region
      %99 = dma.done [#allocation7], 16
    $region37: #{net_forward.1} parent=1 // pred_fallthru
      _
    // Predicated region
    $region38: #{net_forward.1} parent=1 // pred_check
      _
    $region39: #{net_forward.1} parent=1 // pred_check_branch
      %101 = sbr.rel (0) target = $region41
    $region40: #{net_forward.1} parent=1 // pred_region
      %103 = dma.done [#allocation10], 1024
    $region41: #{net_forward.1} parent=1 // pred_fallthru
      _
    // Predicated region
    $region42: #{net_forward.1} parent=1 // pred_check
      _
    $region43: #{net_forward.1} parent=1 // pred_check_branch
      %105 = sbr.rel (0) target = $region45
    $region44: #{net_forward.1} parent=1 // pred_region
      %107 = dma.done [#allocation10], 1024
    $region45: #{net_forward.1} parent=1 // pred_fallthru
      _
    %v108 = vld [vmem:[#allocation4] sm:$0xf]
    %v109 = vld [vmem:[#allocation4 + $0x4] sm:$0xf]
    %v110 = vld [vmem:[#allocation4 + $0x8] sm:$0xf]
    %v111 = vld [vmem:[#allocation4 + $0xc] sm:$0xf]
    %v112 = vld [vmem:[#allocation4 + $0x10] sm:$0xf]
    %v113 = vld [vmem:[#allocation4 + $0x14] sm:$0xf]
    %v114 = vld [vmem:[#allocation4 + $0x18] sm:$0xf]
    %v115 = vld [vmem:[#allocation4 + $0x1c] sm:$0xf]
    %v116 = vld [vmem:[#allocation4 + $0x20] sm:$0xf]
    %v117 = vld [vmem:[#allocation4 + $0x24] sm:$0xf]
    %v118 = vld [vmem:[#allocation4 + $0x28] sm:$0xf]
    %v119 = vld [vmem:[#allocation4 + $0x2c] sm:$0xf]
    %v120 = vld [vmem:[#allocation4 + $0x30] sm:$0xf]
    %v121 = vld [vmem:[#allocation4 + $0x34] sm:$0xf]
    %v122 = vld [vmem:[#allocation4 + $0x38] sm:$0xf]
    %v123 = vld [vmem:[#allocation4 + $0x3c] sm:$0xf]
    %v124 = vld [vmem:[#allocation6] sm:$0xf]
    %v125 = vld [vmem:[#allocation6 + $0x4] sm:$0xf]
    %v126 = vld [vmem:[#allocation6 + $0x8] sm:$0xf]
    %v127 = vld [vmem:[#allocation6 + $0xc] sm:$0xf]
    %v128 = vld [vmem:[#allocation6 + $0x10] sm:$0xf]
    %v129 = vld [vmem:[#allocation6 + $0x14] sm:$0xf]
    %v130 = vld [vmem:[#allocation6 + $0x18] sm:$0xf]
    %v131 = vld [vmem:[#allocation6 + $0x1c] sm:$0xf]
    %v132 = vld [vmem:[#allocation6 + $0x20] sm:$0xf]
    %v133 = vld [vmem:[#allocation6 + $0x24] sm:$0xf]
    %v134 = vld [vmem:[#allocation6 + $0x28] sm:$0xf]
    %v135 = vld [vmem:[#allocation6 + $0x2c] sm:$0xf]
    %v136 = vld [vmem:[#allocation6 + $0x30] sm:$0xf]
    %v137 = vld [vmem:[#allocation6 + $0x34] sm:$0xf]
    %v138 = vld [vmem:[#allocation6 + $0x38] sm:$0xf]
    %v139 = vld [vmem:[#allocation6 + $0x3c] sm:$0xf]
    %v140 = vld [vmem:[#allocation8] sm:$0x1]
    %v141 = vunpack.c.l.bf16 %v140
    %v142 = vperm.slane %v141, 0
    %v159 = vunpack.c.l.b16 %v108
    %v160 = vunpack.c.l.b16 %v109
    %v161 = vunpack.c.l.b16 %v110
    %v162 = vunpack.c.l.b16 %v111
    %v163 = vunpack.c.l.b16 %v112
    %v164 = vunpack.c.l.b16 %v113
    %v165 = vunpack.c.l.b16 %v114
    %v166 = vunpack.c.l.b16 %v115
    %v167 = vunpack.c.l.b16 %v116
    %v168 = vunpack.c.l.b16 %v117
    %v169 = vunpack.c.l.b16 %v118
    %v170 = vunpack.c.l.b16 %v119
    %v171 = vunpack.c.l.b16 %v120
    %v172 = vunpack.c.l.b16 %v121
    %v173 = vunpack.c.l.b16 %v122
    %v174 = vunpack.c.l.b16 %v123
    %v175 = vpack.c.b16 %v160, %v159
    %v176 = vpack.c.b16 %v162, %v161
    %v177 = vpack.c.b16 %v164, %v163
    %v178 = vpack.c.b16 %v166, %v165
    %v179 = vpack.c.b16 %v168, %v167
    %v180 = vpack.c.b16 %v170, %v169
    %v181 = vpack.c.b16 %v172, %v171
    %v182 = vpack.c.b16 %v174, %v173
    %v207 = vunpack.c.l.b16 %v124
    %v208 = vunpack.c.l.b16 %v125
    %v209 = vunpack.c.l.b16 %v126
    %v210 = vunpack.c.l.b16 %v127
    %v211 = vunpack.c.l.b16 %v128
    %v212 = vunpack.c.l.b16 %v129
    %v213 = vunpack.c.l.b16 %v130
    %v214 = vunpack.c.l.b16 %v131
    %v215 = vunpack.c.l.b16 %v132
    %v216 = vunpack.c.l.b16 %v133
    %v217 = vunpack.c.l.b16 %v134
    %v218 = vunpack.c.l.b16 %v135
    %v219 = vunpack.c.l.b16 %v136
    %v220 = vunpack.c.l.b16 %v137
    %v221 = vunpack.c.l.b16 %v138
    %v222 = vunpack.c.l.b16 %v139
    %v223 = vpack.c.b16 %v208, %v207
    %v224 = vpack.c.b16 %v210, %v209
    %v225 = vpack.c.b16 %v212, %v211
    %v226 = vpack.c.b16 %v214, %v213
    %v227 = vpack.c.b16 %v216, %v215
    %v228 = vpack.c.b16 %v218, %v217
    %v229 = vpack.c.b16 %v220, %v219
    %v230 = vpack.c.b16 %v222, %v221
    %239 = vmatpush.bf16.msra.mxu0 %v230
    %240 = vmatpush.bf16.msra.mxu0 %v229
    %241 = vmatpush.bf16.msra.mxu0 %v228
    %242 = vmatpush.bf16.msra.mxu0 %v227
    %243 = vmatpush.bf16.msra.mxu0 %v226
    %244 = vmatpush.bf16.msra.mxu0 %v225
    %245 = vmatpush.bf16.msra.mxu0 %v224
    %246 = vmatpush.bf16.msra.mxu0 %v223
    %247 = vmatmul.bf16.gmra.mxu0 %v175
    %v248 = vpop.f32.mrf.mxu0
    %v249 = vadd.f32 %v142, %v248
    %v250 = vpop.f32.mrf.mxu0
    %v251 = vadd.f32 %v142, %v250
    %252 = vmatmul.bf16.gmra.mxu0 %v176
    %v253 = vpop.f32.mrf.mxu0
    %v254 = vadd.f32 %v142, %v253
    %v255 = vpop.f32.mrf.mxu0
    %v256 = vadd.f32 %v142, %v255
    %257 = vmatmul.bf16.gmra.mxu0 %v177
    %v258 = vpop.f32.mrf.mxu0
    %v259 = vadd.f32 %v142, %v258
    %v260 = vpop.f32.mrf.mxu0
    %v261 = vadd.f32 %v142, %v260
    %262 = vmatmul.bf16.gmra.mxu0 %v178
    %v263 = vpop.f32.mrf.mxu0
    %v264 = vadd.f32 %v142, %v263
    %v265 = vpop.f32.mrf.mxu0
    %v266 = vadd.f32 %v142, %v265
    %267 = vmatmul.bf16.gmra.mxu0 %v179
    %v268 = vpop.f32.mrf.mxu0
    %v269 = vadd.f32 %v142, %v268
    %v270 = vpop.f32.mrf.mxu0
    %v271 = vadd.f32 %v142, %v270
    %272 = vmatmul.bf16.gmra.mxu0 %v180
    %v273 = vpop.f32.mrf.mxu0
    %v274 = vadd.f32 %v142, %v273
    %v275 = vpop.f32.mrf.mxu0
    %v276 = vadd.f32 %v142, %v275
    %277 = vmatmul.bf16.gmra.mxu0 %v181
    %v278 = vpop.f32.mrf.mxu0
    %v279 = vadd.f32 %v142, %v278
    %v280 = vpop.f32.mrf.mxu0
    %v281 = vadd.f32 %v142, %v280
    %282 = vmatmul.bf16.gmra.mxu0 %v182
    %v283 = vpop.f32.mrf.mxu0
    %v284 = vadd.f32 %v142, %v283
    %v285 = vpop.f32.mrf.mxu0
    %v286 = vadd.f32 %v142, %v285
    %287 = vdwg.mxu0
    %v288 = vmax.f32 %v249, 0.0
    %v289 = vmax.f32 %v251, 0.0
    %v290 = vmax.f32 %v254, 0.0
    %v291 = vmax.f32 %v256, 0.0
    %v292 = vmax.f32 %v259, 0.0
    %v293 = vmax.f32 %v261, 0.0
    %v294 = vmax.f32 %v264, 0.0
    %v295 = vmax.f32 %v266, 0.0
    %v296 = vmax.f32 %v269, 0.0
    %v297 = vmax.f32 %v271, 0.0
    %v298 = vmax.f32 %v274, 0.0
    %v299 = vmax.f32 %v276, 0.0
    %v300 = vmax.f32 %v279, 0.0
    %v301 = vmax.f32 %v281, 0.0
    %v302 = vmax.f32 %v284, 0.0
    %v303 = vmax.f32 %v286, 0.0
    %s304 = sld [smem:[#allocation3]]
    %v305 = vmul.f32 %v288, %v288
    %v306 = vmul.f32 %v289, %v289
    %v307 = vmul.f32 %v290, %v290
    %v308 = vmul.f32 %v291, %v291
    %v309 = vmul.f32 %v292, %v292
    %v310 = vmul.f32 %v293, %v293
    %v311 = vmul.f32 %v294, %v294
    %v312 = vmul.f32 %v295, %v295
    %v313 = vmul.f32 %v296, %v296
    %v314 = vmul.f32 %v297, %v297
    %v315 = vmul.f32 %v298, %v298
    %v316 = vmul.f32 %v299, %v299
    %v317 = vmul.f32 %v300, %v300
    %v318 = vmul.f32 %v301, %v301
    %v319 = vmul.f32 %v302, %v302
    %v320 = vmul.f32 %v303, %v303
    %321 = vadd.xlane.f32.xlu0 %v305
    %v322 = vpop.xlane.xlu0 %321
    %323 = vadd.xlane.f32.xlu0 %v306
    %v324 = vpop.xlane.xlu0 %323
    %325 = vadd.xlane.f32.xlu0 %v307
    %v326 = vpop.xlane.xlu0 %325
    %327 = vadd.xlane.f32.xlu0 %v308
    %v328 = vpop.xlane.xlu0 %327
    %329 = vadd.xlane.f32.xlu0 %v309
    %v330 = vpop.xlane.xlu0 %329
    %331 = vadd.xlane.f32.xlu0 %v310
    %v332 = vpop.xlane.xlu0 %331
    %333 = vadd.xlane.f32.xlu0 %v311
    %v334 = vpop.xlane.xlu0 %333
    %335 = vadd.xlane.f32.xlu0 %v312
    %v336 = vpop.xlane.xlu0 %335
    %337 = vadd.xlane.f32.xlu0 %v313
    %v338 = vpop.xlane.xlu0 %337
    %339 = vadd.xlane.f32.xlu0 %v314
    %v340 = vpop.xlane.xlu0 %339
    %341 = vadd.xlane.f32.xlu0 %v315
    %v342 = vpop.xlane.xlu0 %341
    %343 = vadd.xlane.f32.xlu0 %v316
    %v344 = vpop.xlane.xlu0 %343
    %345 = vadd.xlane.f32.xlu0 %v317
    %v346 = vpop.xlane.xlu0 %345
    %347 = vadd.xlane.f32.xlu0 %v318
    %v348 = vpop.xlane.xlu0 %347
    %349 = vadd.xlane.f32.xlu0 %v319
    %v350 = vpop.xlane.xlu0 %349
    %351 = vadd.xlane.f32.xlu0 %v320
    %v352 = vpop.xlane.xlu0 %351
    %v353 = vmax.f32 %v322, 1e-12
    %v354 = vmax.f32 %v324, 1e-12
    %v355 = vmax.f32 %v326, 1e-12
    %v356 = vmax.f32 %v328, 1e-12
    %v357 = vmax.f32 %v330, 1e-12
    %v358 = vmax.f32 %v332, 1e-12
    %v359 = vmax.f32 %v334, 1e-12
    %v360 = vmax.f32 %v336, 1e-12
    %v361 = vmax.f32 %v338, 1e-12
    %v362 = vmax.f32 %v340, 1e-12
    %v363 = vmax.f32 %v342, 1e-12
    %v364 = vmax.f32 %v344, 1e-12
    %v365 = vmax.f32 %v346, 1e-12
    %v366 = vmax.f32 %v348, 1e-12
    %v367 = vmax.f32 %v350, 1e-12
    %v368 = vmax.f32 %v352, 1e-12
    %v369 = vrsqrt.pop %v353
    %v370 = vmul.f32 %v369, %v353
    %v371 = vmul.f32 %v370, %v369
    %v372 = vmul.f32 0.5, %v371
    %v373 = vsub.f32 1.5, %v372
    %v374 = vmul.f32 %v369, %v373
    %vm375 = vweird.f32 %v353
    %vm376 = vweird.f32 %v369
    %vm377 = vmor %vm375, %vm376
    %v378 = vsel %vm377, %v369, %v374
    %v379 = vrsqrt.pop %v354
    %v380 = vmul.f32 %v379, %v354
    %v381 = vmul.f32 %v380, %v379
    %v382 = vmul.f32 0.5, %v381
    %v383 = vsub.f32 1.5, %v382
    %v384 = vmul.f32 %v379, %v383
    %vm385 = vweird.f32 %v354
    %vm386 = vweird.f32 %v379
    %vm387 = vmor %vm385, %vm386
    %v388 = vsel %vm387, %v379, %v384
    %v389 = vrsqrt.pop %v355
    %v390 = vmul.f32 %v389, %v355
    %v391 = vmul.f32 %v390, %v389
    %v392 = vmul.f32 0.5, %v391
    %v393 = vsub.f32 1.5, %v392
    %v394 = vmul.f32 %v389, %v393
    %vm395 = vweird.f32 %v355
    %vm396 = vweird.f32 %v389
    %vm397 = vmor %vm395, %vm396
    %v398 = vsel %vm397, %v389, %v394
    %v399 = vrsqrt.pop %v356
    %v400 = vmul.f32 %v399, %v356
    %v401 = vmul.f32 %v400, %v399
    %v402 = vmul.f32 0.5, %v401
    %v403 = vsub.f32 1.5, %v402
    %v404 = vmul.f32 %v399, %v403
    %vm405 = vweird.f32 %v356
    %vm406 = vweird.f32 %v399
    %vm407 = vmor %vm405, %vm406
    %v408 = vsel %vm407, %v399, %v404
    %v409 = vrsqrt.pop %v357
    %v410 = vmul.f32 %v409, %v357
    %v411 = vmul.f32 %v410, %v409
    %v412 = vmul.f32 0.5, %v411
    %v413 = vsub.f32 1.5, %v412
    %v414 = vmul.f32 %v409, %v413
    %vm415 = vweird.f32 %v357
    %vm416 = vweird.f32 %v409
    %vm417 = vmor %vm415, %vm416
    %v418 = vsel %vm417, %v409, %v414
    %v419 = vrsqrt.pop %v358
    %v420 = vmul.f32 %v419, %v358
    %v421 = vmul.f32 %v420, %v419
    %v422 = vmul.f32 0.5, %v421
    %v423 = vsub.f32 1.5, %v422
    %v424 = vmul.f32 %v419, %v423
    %vm425 = vweird.f32 %v358
    %vm426 = vweird.f32 %v419
    %vm427 = vmor %vm425, %vm426
    %v428 = vsel %vm427, %v419, %v424
    %v429 = vrsqrt.pop %v359
    %v430 = vmul.f32 %v429, %v359
    %v431 = vmul.f32 %v430, %v429
    %v432 = vmul.f32 0.5, %v431
    %v433 = vsub.f32 1.5, %v432
    %v434 = vmul.f32 %v429, %v433
    %vm435 = vweird.f32 %v359
    %vm436 = vweird.f32 %v429
    %vm437 = vmor %vm435, %vm436
    %v438 = vsel %vm437, %v429, %v434
    %v439 = vrsqrt.pop %v360
    %v440 = vmul.f32 %v439, %v360
    %v441 = vmul.f32 %v440, %v439
    %v442 = vmul.f32 0.5, %v441
    %v443 = vsub.f32 1.5, %v442
    %v444 = vmul.f32 %v439, %v443
    %vm445 = vweird.f32 %v360
    %vm446 = vweird.f32 %v439
    %vm447 = vmor %vm445, %vm446
    %v448 = vsel %vm447, %v439, %v444
    %v449 = vrsqrt.pop %v361
    %v450 = vmul.f32 %v449, %v361
    %v451 = vmul.f32 %v450, %v449
    %v452 = vmul.f32 0.5, %v451
    %v453 = vsub.f32 1.5, %v452
    %v454 = vmul.f32 %v449, %v453
    %vm455 = vweird.f32 %v361
    %vm456 = vweird.f32 %v449
    %vm457 = vmor %vm455, %vm456
    %v458 = vsel %vm457, %v449, %v454
    %v459 = vrsqrt.pop %v362
    %v460 = vmul.f32 %v459, %v362
    %v461 = vmul.f32 %v460, %v459
    %v462 = vmul.f32 0.5, %v461
    %v463 = vsub.f32 1.5, %v462
    %v464 = vmul.f32 %v459, %v463
    %vm465 = vweird.f32 %v362
    %vm466 = vweird.f32 %v459
    %vm467 = vmor %vm465, %vm466
    %v468 = vsel %vm467, %v459, %v464
    %v469 = vrsqrt.pop %v363
    %v470 = vmul.f32 %v469, %v363
    %v471 = vmul.f32 %v470, %v469
    %v472 = vmul.f32 0.5, %v471
    %v473 = vsub.f32 1.5, %v472
    %v474 = vmul.f32 %v469, %v473
    %vm475 = vweird.f32 %v363
    %vm476 = vweird.f32 %v469
    %vm477 = vmor %vm475, %vm476
    %v478 = vsel %vm477, %v469, %v474
    %v479 = vrsqrt.pop %v364
    %v480 = vmul.f32 %v479, %v364
    %v481 = vmul.f32 %v480, %v479
    %v482 = vmul.f32 0.5, %v481
    %v483 = vsub.f32 1.5, %v482
    %v484 = vmul.f32 %v479, %v483
    %vm485 = vweird.f32 %v364
    %vm486 = vweird.f32 %v479
    %vm487 = vmor %vm485, %vm486
    %v488 = vsel %vm487, %v479, %v484
    %v489 = vrsqrt.pop %v365
    %v490 = vmul.f32 %v489, %v365
    %v491 = vmul.f32 %v490, %v489
    %v492 = vmul.f32 0.5, %v491
    %v493 = vsub.f32 1.5, %v492
    %v494 = vmul.f32 %v489, %v493
    %vm495 = vweird.f32 %v365
    %vm496 = vweird.f32 %v489
    %vm497 = vmor %vm495, %vm496
    %v498 = vsel %vm497, %v489, %v494
    %v499 = vrsqrt.pop %v366
    %v500 = vmul.f32 %v499, %v366
    %v501 = vmul.f32 %v500, %v499
    %v502 = vmul.f32 0.5, %v501
    %v503 = vsub.f32 1.5, %v502
    %v504 = vmul.f32 %v499, %v503
    %vm505 = vweird.f32 %v366
    %vm506 = vweird.f32 %v499
    %vm507 = vmor %vm505, %vm506
    %v508 = vsel %vm507, %v499, %v504
    %v509 = vrsqrt.pop %v367
    %v510 = vmul.f32 %v509, %v367
    %v511 = vmul.f32 %v510, %v509
    %v512 = vmul.f32 0.5, %v511
    %v513 = vsub.f32 1.5, %v512
    %v514 = vmul.f32 %v509, %v513
    %vm515 = vweird.f32 %v367
    %vm516 = vweird.f32 %v509
    %vm517 = vmor %vm515, %vm516
    %v518 = vsel %vm517, %v509, %v514
    %v519 = vrsqrt.pop %v368
    %v520 = vmul.f32 %v519, %v368
    %v521 = vmul.f32 %v520, %v519
    %v522 = vmul.f32 0.5, %v521
    %v523 = vsub.f32 1.5, %v522
    %v524 = vmul.f32 %v519, %v523
    %vm525 = vweird.f32 %v368
    %vm526 = vweird.f32 %v519
    %vm527 = vmor %vm525, %vm526
    %v528 = vsel %vm527, %v519, %v524
    %v529 = vmul.f32 %v288, %v378
    %v530 = vmul.f32 %v289, %v388
    %v531 = vmul.f32 %v290, %v398
    %v532 = vmul.f32 %v291, %v408
    %v533 = vmul.f32 %v292, %v418
    %v534 = vmul.f32 %v293, %v428
    %v535 = vmul.f32 %v294, %v438
    %v536 = vmul.f32 %v295, %v448
    %v537 = vmul.f32 %v296, %v458
    %v538 = vmul.f32 %v297, %v468
    %v539 = vmul.f32 %v298, %v478
    %v540 = vmul.f32 %v299, %v488
    %v541 = vmul.f32 %v300, %v498
    %v542 = vmul.f32 %v301, %v508
    %v543 = vmul.f32 %v302, %v518
    %v544 = vmul.f32 %v303, %v528
    %v545 = vstv %s304
    %v546 = vmul.f32 %v529, %v545
    %v547 = vmul.f32 %v530, %v545
    %v548 = vmul.f32 %v531, %v545
    %v549 = vmul.f32 %v532, %v545
    %v550 = vmul.f32 %v533, %v545
    %v551 = vmul.f32 %v534, %v545
    %v552 = vmul.f32 %v535, %v545
    %v553 = vmul.f32 %v536, %v545
    %v554 = vmul.f32 %v537, %v545
    %v555 = vmul.f32 %v538, %v545
    %v556 = vmul.f32 %v539, %v545
    %v557 = vmul.f32 %v540, %v545
    %v558 = vmul.f32 %v541, %v545
    %v559 = vmul.f32 %v542, %v545
    %v560 = vmul.f32 %v543, %v545
    %v561 = vmul.f32 %v544, %v545
    %v562 = vpack.c.bf16 %v547, %v546
    %v563 = vpack.c.bf16 %v549, %v548
    %v564 = vpack.c.bf16 %v551, %v550
    %v565 = vpack.c.bf16 %v553, %v552
    %v566 = vpack.c.bf16 %v555, %v554
    %v567 = vpack.c.bf16 %v557, %v556
    %v568 = vpack.c.bf16 %v559, %v558
    %v569 = vpack.c.bf16 %v561, %v560
    %v570 = vpack.c.bf16 %v530, %v529
    %v571 = vpack.c.bf16 %v532, %v531
    %v572 = vpack.c.bf16 %v534, %v533
    %v573 = vpack.c.bf16 %v536, %v535
    %v574 = vpack.c.bf16 %v538, %v537
    %v575 = vpack.c.bf16 %v540, %v539
    %v576 = vpack.c.bf16 %v542, %v541
    %v577 = vpack.c.bf16 %v544, %v543
    %v578 = vld [vmem:[#allocation9] sm:$0xf]
    %v579 = vld [vmem:[#allocation9 + $0x4] sm:$0xf]
    %v580 = vld [vmem:[#allocation9 + $0x8] sm:$0xf]
    %v581 = vld [vmem:[#allocation9 + $0xc] sm:$0xf]
    %v582 = vld [vmem:[#allocation9 + $0x10] sm:$0xf]
    %v583 = vld [vmem:[#allocation9 + $0x14] sm:$0xf]
    %v584 = vld [vmem:[#allocation9 + $0x18] sm:$0xf]
    %v585 = vld [vmem:[#allocation9 + $0x1c] sm:$0xf]
    %v586 = vld [vmem:[#allocation9 + $0x20] sm:$0xf]
    %v587 = vld [vmem:[#allocation9 + $0x24] sm:$0xf]
    %v588 = vld [vmem:[#allocation9 + $0x28] sm:$0xf]
    %v589 = vld [vmem:[#allocation9 + $0x2c] sm:$0xf]
    %v590 = vld [vmem:[#allocation9 + $0x30] sm:$0xf]
    %v591 = vld [vmem:[#allocation9 + $0x34] sm:$0xf]
    %v592 = vld [vmem:[#allocation9 + $0x38] sm:$0xf]
    %v593 = vld [vmem:[#allocation9 + $0x3c] sm:$0xf]
    %v594 = vunpack.c.l.bf16 %v578
    %v595 = vunpack.c.l.bf16 %v579
    %v596 = vunpack.c.l.bf16 %v580
    %v597 = vunpack.c.l.bf16 %v581
    %v598 = vunpack.c.l.bf16 %v582
    %v599 = vunpack.c.l.bf16 %v583
    %v600 = vunpack.c.l.bf16 %v584
    %v601 = vunpack.c.l.bf16 %v585
    %v602 = vunpack.c.l.bf16 %v586
    %v603 = vunpack.c.l.bf16 %v587
    %v604 = vunpack.c.l.bf16 %v588
    %v605 = vunpack.c.l.bf16 %v589
    %v606 = vunpack.c.l.bf16 %v590
    %v607 = vunpack.c.l.bf16 %v591
    %v608 = vunpack.c.l.bf16 %v592
    %v609 = vunpack.c.l.bf16 %v593
    %610 = vmatpush.bf16.xpose.msra.mxu0 %v577
    %611 = vmatpush.bf16.xpose.msra.mxu0 %v576
    %612 = vmatpush.bf16.xpose.msra.mxu0 %v575
    %613 = vmatpush.bf16.xpose.msra.mxu0 %v574
    %614 = vmatpush.bf16.xpose.msra.mxu0 %v573
    %615 = vmatpush.bf16.xpose.msra.mxu0 %v572
    %616 = vmatpush.bf16.xpose.msra.mxu0 %v571
    %617 = vmatpush.bf16.xpose.msra.mxu0 %v570
    %618 = vmatmul.bf16.gmra.mxu0 %v562
    %v619 = vpop.f32.mrf.mxu0
    %v620 = vadd.f32 %v594, %v619
    %v621 = vpop.f32.mrf.mxu0
    %v622 = vadd.f32 %v595, %v621
    %623 = vmatmul.bf16.gmra.mxu0 %v563
    %v624 = vpop.f32.mrf.mxu0
    %v625 = vadd.f32 %v596, %v624
    %v626 = vpop.f32.mrf.mxu0
    %v627 = vadd.f32 %v597, %v626
    %628 = vmatmul.bf16.gmra.mxu0 %v564
    %v629 = vpop.f32.mrf.mxu0
    %v630 = vadd.f32 %v598, %v629
    %v631 = vpop.f32.mrf.mxu0
    %v632 = vadd.f32 %v599, %v631
    %633 = vmatmul.bf16.gmra.mxu0 %v565
    %v634 = vpop.f32.mrf.mxu0
    %v635 = vadd.f32 %v600, %v634
    %v636 = vpop.f32.mrf.mxu0
    %v637 = vadd.f32 %v601, %v636
    %638 = vmatmul.bf16.gmra.mxu0 %v566
    %v639 = vpop.f32.mrf.mxu0
    %v640 = vadd.f32 %v602, %v639
    %v641 = vpop.f32.mrf.mxu0
    %v642 = vadd.f32 %v603, %v641
    %643 = vmatmul.bf16.gmra.mxu0 %v567
    %v644 = vpop.f32.mrf.mxu0
    %v645 = vadd.f32 %v604, %v644
    %v646 = vpop.f32.mrf.mxu0
    %v647 = vadd.f32 %v605, %v646
    %648 = vmatmul.bf16.gmra.mxu0 %v568
    %v649 = vpop.f32.mrf.mxu0
    %v650 = vadd.f32 %v606, %v649
    %v651 = vpop.f32.mrf.mxu0
    %v652 = vadd.f32 %v607, %v651
    %653 = vmatmul.bf16.gmra.mxu0 %v569
    %v654 = vpop.f32.mrf.mxu0
    %v655 = vadd.f32 %v608, %v654
    %v656 = vpop.f32.mrf.mxu0
    %v657 = vadd.f32 %v609, %v656
    %658 = vdwg.mxu0
    %659 = vmax.xlane.f32.xlu0 %v620
    %v660 = vpop.xlane.xlu0 %659
    %661 = vmax.xlane.f32.xlu0 %v622
    %v662 = vpop.xlane.xlu0 %661
    %663 = vmax.xlane.f32.xlu0 %v625
    %v664 = vpop.xlane.xlu0 %663
    %665 = vmax.xlane.f32.xlu0 %v627
    %v666 = vpop.xlane.xlu0 %665
    %667 = vmax.xlane.f32.xlu0 %v630
    %v668 = vpop.xlane.xlu0 %667
    %669 = vmax.xlane.f32.xlu0 %v632
    %v670 = vpop.xlane.xlu0 %669
    %671 = vmax.xlane.f32.xlu0 %v635
    %v672 = vpop.xlane.xlu0 %671
    %673 = vmax.xlane.f32.xlu0 %v637
    %v674 = vpop.xlane.xlu0 %673
    %675 = vmax.xlane.f32.xlu0 %v640
    %v676 = vpop.xlane.xlu0 %675
    %677 = vmax.xlane.f32.xlu0 %v642
    %v678 = vpop.xlane.xlu0 %677
    %679 = vmax.xlane.f32.xlu0 %v645
    %v680 = vpop.xlane.xlu0 %679
    %681 = vmax.xlane.f32.xlu0 %v647
    %v682 = vpop.xlane.xlu0 %681
    %683 = vmax.xlane.f32.xlu0 %v650
    %v684 = vpop.xlane.xlu0 %683
    %685 = vmax.xlane.f32.xlu0 %v652
    %v686 = vpop.xlane.xlu0 %685
    %687 = vmax.xlane.f32.xlu0 %v655
    %v688 = vpop.xlane.xlu0 %687
    %689 = vmax.xlane.f32.xlu0 %v657
    %v690 = vpop.xlane.xlu0 %689
    %v691 = vsub.f32 %v620, %v660
    %v692 = vsub.f32 %v622, %v662
    %v693 = vsub.f32 %v625, %v664
    %v694 = vsub.f32 %v627, %v666
    %v695 = vsub.f32 %v630, %v668
    %v696 = vsub.f32 %v632, %v670
    %v697 = vsub.f32 %v635, %v672
    %v698 = vsub.f32 %v637, %v674
    %v699 = vsub.f32 %v640, %v676
    %v700 = vsub.f32 %v642, %v678
    %v701 = vsub.f32 %v645, %v680
    %v702 = vsub.f32 %v647, %v682
    %v703 = vsub.f32 %v650, %v684
    %v704 = vsub.f32 %v652, %v686
    %v705 = vsub.f32 %v655, %v688
    %v706 = vsub.f32 %v657, %v690
    %v707 = vmul.f32 %v691, 1.442695
    %v708 = vpow.pop %v707
    %v709 = vmul.f32 %v692, 1.442695
    %v710 = vpow.pop %v709
    %v711 = vmul.f32 %v693, 1.442695
    %v712 = vpow.pop %v711
    %v713 = vmul.f32 %v694, 1.442695
    %v714 = vpow.pop %v713
    %v715 = vmul.f32 %v695, 1.442695
    %v716 = vpow.pop %v715
    %v717 = vmul.f32 %v696, 1.442695
    %v718 = vpow.pop %v717
    %v719 = vmul.f32 %v697, 1.442695
    %v720 = vpow.pop %v719
    %v721 = vmul.f32 %v698, 1.442695
    %v722 = vpow.pop %v721
    %v723 = vmul.f32 %v699, 1.442695
    %v724 = vpow.pop %v723
    %v725 = vmul.f32 %v700, 1.442695
    %v726 = vpow.pop %v725
    %v727 = vmul.f32 %v701, 1.442695
    %v728 = vpow.pop %v727
    %v729 = vmul.f32 %v702, 1.442695
    %v730 = vpow.pop %v729
    %v731 = vmul.f32 %v703, 1.442695
    %v732 = vpow.pop %v731
    %v733 = vmul.f32 %v704, 1.442695
    %v734 = vpow.pop %v733
    %v735 = vmul.f32 %v705, 1.442695
    %v736 = vpow.pop %v735
    %v737 = vmul.f32 %v706, 1.442695
    %v738 = vpow.pop %v737
    %739 = vadd.xlane.f32.xlu0 %v708
    %v740 = vpop.xlane.xlu0 %739
    %741 = vadd.xlane.f32.xlu0 %v710
    %v742 = vpop.xlane.xlu0 %741
    %743 = vadd.xlane.f32.xlu0 %v712
    %v744 = vpop.xlane.xlu0 %743
    %745 = vadd.xlane.f32.xlu0 %v714
    %v746 = vpop.xlane.xlu0 %745
    %747 = vadd.xlane.f32.xlu0 %v716
    %v748 = vpop.xlane.xlu0 %747
    %749 = vadd.xlane.f32.xlu0 %v718
    %v750 = vpop.xlane.xlu0 %749
    %751 = vadd.xlane.f32.xlu0 %v720
    %v752 = vpop.xlane.xlu0 %751
    %753 = vadd.xlane.f32.xlu0 %v722
    %v754 = vpop.xlane.xlu0 %753
    %755 = vadd.xlane.f32.xlu0 %v724
    %v756 = vpop.xlane.xlu0 %755
    %757 = vadd.xlane.f32.xlu0 %v726
    %v758 = vpop.xlane.xlu0 %757
    %759 = vadd.xlane.f32.xlu0 %v728
    %v760 = vpop.xlane.xlu0 %759
    %761 = vadd.xlane.f32.xlu0 %v730
    %v762 = vpop.xlane.xlu0 %761
    %763 = vadd.xlane.f32.xlu0 %v732
    %v764 = vpop.xlane.xlu0 %763
    %765 = vadd.xlane.f32.xlu0 %v734
    %v766 = vpop.xlane.xlu0 %765
    %767 = vadd.xlane.f32.xlu0 %v736
    %v768 = vpop.xlane.xlu0 %767
    %769 = vadd.xlane.f32.xlu0 %v738
    %v770 = vpop.xlane.xlu0 %769
    %v771 = vmax.f32 %v740, 1e-12
    %v772 = vmax.f32 %v742, 1e-12
    %v773 = vmax.f32 %v744, 1e-12
    %v774 = vmax.f32 %v746, 1e-12
    %v775 = vmax.f32 %v748, 1e-12
    %v776 = vmax.f32 %v750, 1e-12
    %v777 = vmax.f32 %v752, 1e-12
    %v778 = vmax.f32 %v754, 1e-12
    %v779 = vmax.f32 %v756, 1e-12
    %v780 = vmax.f32 %v758, 1e-12
    %v781 = vmax.f32 %v760, 1e-12
    %v782 = vmax.f32 %v762, 1e-12
    %v783 = vmax.f32 %v764, 1e-12
    %v784 = vmax.f32 %v766, 1e-12
    %v785 = vmax.f32 %v768, 1e-12
    %v786 = vmax.f32 %v770, 1e-12
    %v787 = vrcp.pop %v771
    %v788 = vrcp.pop %v772
    %v789 = vrcp.pop %v773
    %v790 = vrcp.pop %v774
    %v791 = vrcp.pop %v775
    %v792 = vrcp.pop %v776
    %v793 = vrcp.pop %v777
    %v794 = vrcp.pop %v778
    %v795 = vrcp.pop %v779
    %v796 = vrcp.pop %v780
    %v797 = vrcp.pop %v781
    %v798 = vrcp.pop %v782
    %v799 = vrcp.pop %v783
    %v800 = vrcp.pop %v784
    %v801 = vrcp.pop %v785
    %v802 = vrcp.pop %v786
    %v803 = vmul.f32 %v708, %v787
    %v804 = vmul.f32 %v710, %v788
    %v805 = vmul.f32 %v712, %v789
    %v806 = vmul.f32 %v714, %v790
    %v807 = vmul.f32 %v716, %v791
    %v808 = vmul.f32 %v718, %v792
    %v809 = vmul.f32 %v720, %v793
    %v810 = vmul.f32 %v722, %v794
    %v811 = vmul.f32 %v724, %v795
    %v812 = vmul.f32 %v726, %v796
    %v813 = vmul.f32 %v728, %v797
    %v814 = vmul.f32 %v730, %v798
    %v815 = vmul.f32 %v732, %v799
    %v816 = vmul.f32 %v734, %v800
    %v817 = vmul.f32 %v736, %v801
    %v818 = vmul.f32 %v738, %v802
    %v819 = vpack.c.bf16 %v804, %v803
    %v820 = vpack.c.bf16 %v806, %v805
    %v821 = vpack.c.bf16 %v808, %v807
    %v822 = vpack.c.bf16 %v810, %v809
    %v823 = vpack.c.bf16 %v812, %v811
    %v824 = vpack.c.bf16 %v814, %v813
    %v825 = vpack.c.bf16 %v816, %v815
    %v826 = vpack.c.bf16 %v818, %v817
    %v827 = vpack.c.bf16 %v289, %v288
    %v828 = vpack.c.bf16 %v291, %v290
    %v829 = vpack.c.bf16 %v293, %v292
    %v830 = vpack.c.bf16 %v295, %v294
    %v831 = vpack.c.bf16 %v297, %v296
    %v832 = vpack.c.bf16 %v299, %v298
    %v833 = vpack.c.bf16 %v301, %v300
    %v834 = vpack.c.bf16 %v303, %v302
    %835 = vmatpush.bf16.msra.mxu0 %v834
    %836 = vmatpush.bf16.msra.mxu0 %v833
    %837 = vmatpush.bf16.msra.mxu0 %v832
    %838 = vmatpush.bf16.msra.mxu0 %v831
    %839 = vmatpush.bf16.msra.mxu0 %v830
    %840 = vmatpush.bf16.msra.mxu0 %v829
    %841 = vmatpush.bf16.msra.mxu0 %v828
    %842 = vmatpush.bf16.msra.mxu0 %v827
    %843 = vmatmul.bf16.gmra.mxu0 %v819
    %v844 = vpop.f32.mrf.mxu0
    %v845 = vadd.f32 0.0, %v844
    %v846 = vpop.f32.mrf.mxu0
    %v847 = vadd.f32 0.0, %v846
    %848 = vmatmul.bf16.gmra.mxu0 %v820
    %v849 = vpop.f32.mrf.mxu0
    %v850 = vadd.f32 0.0, %v849
    %v851 = vpop.f32.mrf.mxu0
    %v852 = vadd.f32 0.0, %v851
    %853 = vmatmul.bf16.gmra.mxu0 %v821
    %v854 = vpop.f32.mrf.mxu0
    %v855 = vadd.f32 0.0, %v854
    %v856 = vpop.f32.mrf.mxu0
    %v857 = vadd.f32 0.0, %v856
    %858 = vmatmul.bf16.gmra.mxu0 %v822
    %v859 = vpop.f32.mrf.mxu0
    %v860 = vadd.f32 0.0, %v859
    %v861 = vpop.f32.mrf.mxu0
    %v862 = vadd.f32 0.0, %v861
    %863 = vmatmul.bf16.gmra.mxu0 %v823
    %v864 = vpop.f32.mrf.mxu0
    %v865 = vadd.f32 0.0, %v864
    %v866 = vpop.f32.mrf.mxu0
    %v867 = vadd.f32 0.0, %v866
    %868 = vmatmul.bf16.gmra.mxu0 %v824
    %v869 = vpop.f32.mrf.mxu0
    %v870 = vadd.f32 0.0, %v869
    %v871 = vpop.f32.mrf.mxu0
    %v872 = vadd.f32 0.0, %v871
    %873 = vmatmul.bf16.gmra.mxu0 %v825
    %v874 = vpop.f32.mrf.mxu0
    %v875 = vadd.f32 0.0, %v874
    %v876 = vpop.f32.mrf.mxu0
    %v877 = vadd.f32 0.0, %v876
    %878 = vmatmul.bf16.gmra.mxu0 %v826
    %v879 = vpop.f32.mrf.mxu0
    %v880 = vadd.f32 0.0, %v879
    %v881 = vpop.f32.mrf.mxu0
    %v882 = vadd.f32 0.0, %v881
    %883 = vdwg.mxu0
    %v884 = vmax.f32 %v845, 0.0
    %v885 = vmax.f32 %v847, 0.0
    %v886 = vmax.f32 %v850, 0.0
    %v887 = vmax.f32 %v852, 0.0
    %v888 = vmax.f32 %v855, 0.0
    %v889 = vmax.f32 %v857, 0.0
    %v890 = vmax.f32 %v860, 0.0
    %v891 = vmax.f32 %v862, 0.0
    %v892 = vmax.f32 %v865, 0.0
    %v893 = vmax.f32 %v867, 0.0
    %v894 = vmax.f32 %v870, 0.0
    %v895 = vmax.f32 %v872, 0.0
    %v896 = vmax.f32 %v875, 0.0
    %v897 = vmax.f32 %v877, 0.0
    %v898 = vmax.f32 %v880, 0.0
    %v899 = vmax.f32 %v882, 0.0
    %s900 = sld [smem:[#allocation3 + $0x1]]
    %v901 = vmul.f32 %v884, %v884
    %v902 = vmul.f32 %v885, %v885
    %v903 = vmul.f32 %v886, %v886
    %v904 = vmul.f32 %v887, %v887
    %v905 = vmul.f32 %v888, %v888
    %v906 = vmul.f32 %v889, %v889
    %v907 = vmul.f32 %v890, %v890
    %v908 = vmul.f32 %v891, %v891
    %v909 = vmul.f32 %v892, %v892
    %v910 = vmul.f32 %v893, %v893
    %v911 = vmul.f32 %v894, %v894
    %v912 = vmul.f32 %v895, %v895
    %v913 = vmul.f32 %v896, %v896
    %v914 = vmul.f32 %v897, %v897
    %v915 = vmul.f32 %v898, %v898
    %v916 = vmul.f32 %v899, %v899
    %917 = vadd.xlane.f32.xlu0 %v901
    %v918 = vpop.xlane.xlu0 %917
    %919 = vadd.xlane.f32.xlu0 %v902
    %v920 = vpop.xlane.xlu0 %919
    %921 = vadd.xlane.f32.xlu0 %v903
    %v922 = vpop.xlane.xlu0 %921
    %923 = vadd.xlane.f32.xlu0 %v904
    %v924 = vpop.xlane.xlu0 %923
    %925 = vadd.xlane.f32.xlu0 %v905
    %v926 = vpop.xlane.xlu0 %925
    %927 = vadd.xlane.f32.xlu0 %v906
    %v928 = vpop.xlane.xlu0 %927
    %929 = vadd.xlane.f32.xlu0 %v907
    %v930 = vpop.xlane.xlu0 %929
    %931 = vadd.xlane.f32.xlu0 %v908
    %v932 = vpop.xlane.xlu0 %931
    %933 = vadd.xlane.f32.xlu0 %v909
    %v934 = vpop.xlane.xlu0 %933
    %935 = vadd.xlane.f32.xlu0 %v910
    %v936 = vpop.xlane.xlu0 %935
    %937 = vadd.xlane.f32.xlu0 %v911
    %v938 = vpop.xlane.xlu0 %937
    %939 = vadd.xlane.f32.xlu0 %v912
    %v940 = vpop.xlane.xlu0 %939
    %941 = vadd.xlane.f32.xlu0 %v913
    %v942 = vpop.xlane.xlu0 %941
    %943 = vadd.xlane.f32.xlu0 %v914
    %v944 = vpop.xlane.xlu0 %943
    %945 = vadd.xlane.f32.xlu0 %v915
    %v946 = vpop.xlane.xlu0 %945
    %947 = vadd.xlane.f32.xlu0 %v916
    %v948 = vpop.xlane.xlu0 %947
    %v949 = vmax.f32 %v918, 1e-12
    %v950 = vmax.f32 %v920, 1e-12
    %v951 = vmax.f32 %v922, 1e-12
    %v952 = vmax.f32 %v924, 1e-12
    %v953 = vmax.f32 %v926, 1e-12
    %v954 = vmax.f32 %v928, 1e-12
    %v955 = vmax.f32 %v930, 1e-12
    %v956 = vmax.f32 %v932, 1e-12
    %v957 = vmax.f32 %v934, 1e-12
    %v958 = vmax.f32 %v936, 1e-12
    %v959 = vmax.f32 %v938, 1e-12
    %v960 = vmax.f32 %v940, 1e-12
    %v961 = vmax.f32 %v942, 1e-12
    %v962 = vmax.f32 %v944, 1e-12
    %v963 = vmax.f32 %v946, 1e-12
    %v964 = vmax.f32 %v948, 1e-12
    %v965 = vrsqrt.pop %v949
    %v966 = vmul.f32 %v965, %v949
    %v967 = vmul.f32 %v966, %v965
    %v968 = vmul.f32 0.5, %v967
    %v969 = vsub.f32 1.5, %v968
    %v970 = vmul.f32 %v965, %v969
    %vm971 = vweird.f32 %v949
    %vm972 = vweird.f32 %v965
    %vm973 = vmor %vm971, %vm972
    %v974 = vsel %vm973, %v965, %v970
    %v975 = vrsqrt.pop %v950
    %v976 = vmul.f32 %v975, %v950
    %v977 = vmul.f32 %v976, %v975
    %v978 = vmul.f32 0.5, %v977
    %v979 = vsub.f32 1.5, %v978
    %v980 = vmul.f32 %v975, %v979
    %vm981 = vweird.f32 %v950
    %vm982 = vweird.f32 %v975
    %vm983 = vmor %vm981, %vm982
    %v984 = vsel %vm983, %v975, %v980
    %v985 = vrsqrt.pop %v951
    %v986 = vmul.f32 %v985, %v951
    %v987 = vmul.f32 %v986, %v985
    %v988 = vmul.f32 0.5, %v987
    %v989 = vsub.f32 1.5, %v988
    %v990 = vmul.f32 %v985, %v989
    %vm991 = vweird.f32 %v951
    %vm992 = vweird.f32 %v985
    %vm993 = vmor %vm991, %vm992
    %v994 = vsel %vm993, %v985, %v990
    %v995 = vrsqrt.pop %v952
    %v996 = vmul.f32 %v995, %v952
    %v997 = vmul.f32 %v996, %v995
    %v998 = vmul.f32 0.5, %v997
    %v999 = vsub.f32 1.5, %v998
    %v1000 = vmul.f32 %v995, %v999
    %vm1001 = vweird.f32 %v952
    %vm1002 = vweird.f32 %v995
    %vm1003 = vmor %vm1001, %vm1002
    %v1004 = vsel %vm1003, %v995, %v1000
    %v1005 = vrsqrt.pop %v953
    %v1006 = vmul.f32 %v1005, %v953
    %v1007 = vmul.f32 %v1006, %v1005
    %v1008 = vmul.f32 0.5, %v1007
    %v1009 = vsub.f32 1.5, %v1008
    %v1010 = vmul.f32 %v1005, %v1009
    %vm1011 = vweird.f32 %v953
    %vm1012 = vweird.f32 %v1005
    %vm1013 = vmor %vm1011, %vm1012
    %v1014 = vsel %vm1013, %v1005, %v1010
    %v1015 = vrsqrt.pop %v954
    %v1016 = vmul.f32 %v1015, %v954
    %v1017 = vmul.f32 %v1016, %v1015
    %v1018 = vmul.f32 0.5, %v1017
    %v1019 = vsub.f32 1.5, %v1018
    %v1020 = vmul.f32 %v1015, %v1019
    %vm1021 = vweird.f32 %v954
    %vm1022 = vweird.f32 %v1015
    %vm1023 = vmor %vm1021, %vm1022
    %v1024 = vsel %vm1023, %v1015, %v1020
    %v1025 = vrsqrt.pop %v955
    %v1026 = vmul.f32 %v1025, %v955
    %v1027 = vmul.f32 %v1026, %v1025
    %v1028 = vmul.f32 0.5, %v1027
    %v1029 = vsub.f32 1.5, %v1028
    %v1030 = vmul.f32 %v1025, %v1029
    %vm1031 = vweird.f32 %v955
    %vm1032 = vweird.f32 %v1025
    %vm1033 = vmor %vm1031, %vm1032
    %v1034 = vsel %vm1033, %v1025, %v1030
    %v1035 = vrsqrt.pop %v956
    %v1036 = vmul.f32 %v1035, %v956
    %v1037 = vmul.f32 %v1036, %v1035
    %v1038 = vmul.f32 0.5, %v1037
    %v1039 = vsub.f32 1.5, %v1038
    %v1040 = vmul.f32 %v1035, %v1039
    %vm1041 = vweird.f32 %v956
    %vm1042 = vweird.f32 %v1035
    %vm1043 = vmor %vm1041, %vm1042
    %v1044 = vsel %vm1043, %v1035, %v1040
    %v1045 = vrsqrt.pop %v957
    %v1046 = vmul.f32 %v1045, %v957
    %v1047 = vmul.f32 %v1046, %v1045
    %v1048 = vmul.f32 0.5, %v1047
    %v1049 = vsub.f32 1.5, %v1048
    %v1050 = vmul.f32 %v1045, %v1049
    %vm1051 = vweird.f32 %v957
    %vm1052 = vweird.f32 %v1045
    %vm1053 = vmor %vm1051, %vm1052
    %v1054 = vsel %vm1053, %v1045, %v1050
    %v1055 = vrsqrt.pop %v958
    %v1056 = vmul.f32 %v1055, %v958
    %v1057 = vmul.f32 %v1056, %v1055
    %v1058 = vmul.f32 0.5, %v1057
    %v1059 = vsub.f32 1.5, %v1058
    %v1060 = vmul.f32 %v1055, %v1059
    %vm1061 = vweird.f32 %v958
    %vm1062 = vweird.f32 %v1055
    %vm1063 = vmor %vm1061, %vm1062
    %v1064 = vsel %vm1063, %v1055, %v1060
    %v1065 = vrsqrt.pop %v959
    %v1066 = vmul.f32 %v1065, %v959
    %v1067 = vmul.f32 %v1066, %v1065
    %v1068 = vmul.f32 0.5, %v1067
    %v1069 = vsub.f32 1.5, %v1068
    %v1070 = vmul.f32 %v1065, %v1069
    %vm1071 = vweird.f32 %v959
    %vm1072 = vweird.f32 %v1065
    %vm1073 = vmor %vm1071, %vm1072
    %v1074 = vsel %vm1073, %v1065, %v1070
    %v1075 = vrsqrt.pop %v960
    %v1076 = vmul.f32 %v1075, %v960
    %v1077 = vmul.f32 %v1076, %v1075
    %v1078 = vmul.f32 0.5, %v1077
    %v1079 = vsub.f32 1.5, %v1078
    %v1080 = vmul.f32 %v1075, %v1079
    %vm1081 = vweird.f32 %v960
    %vm1082 = vweird.f32 %v1075
    %vm1083 = vmor %vm1081, %vm1082
    %v1084 = vsel %vm1083, %v1075, %v1080
    %v1085 = vrsqrt.pop %v961
    %v1086 = vmul.f32 %v1085, %v961
    %v1087 = vmul.f32 %v1086, %v1085
    %v1088 = vmul.f32 0.5, %v1087
    %v1089 = vsub.f32 1.5, %v1088
    %v1090 = vmul.f32 %v1085, %v1089
    %vm1091 = vweird.f32 %v961
    %vm1092 = vweird.f32 %v1085
    %vm1093 = vmor %vm1091, %vm1092
    %v1094 = vsel %vm1093, %v1085, %v1090
    %v1095 = vrsqrt.pop %v962
    %v1096 = vmul.f32 %v1095, %v962
    %v1097 = vmul.f32 %v1096, %v1095
    %v1098 = vmul.f32 0.5, %v1097
    %v1099 = vsub.f32 1.5, %v1098
    %v1100 = vmul.f32 %v1095, %v1099
    %vm1101 = vweird.f32 %v962
    %vm1102 = vweird.f32 %v1095
    %vm1103 = vmor %vm1101, %vm1102
    %v1104 = vsel %vm1103, %v1095, %v1100
    %v1105 = vrsqrt.pop %v963
    %v1106 = vmul.f32 %v1105, %v963
    %v1107 = vmul.f32 %v1106, %v1105
    %v1108 = vmul.f32 0.5, %v1107
    %v1109 = vsub.f32 1.5, %v1108
    %v1110 = vmul.f32 %v1105, %v1109
    %vm1111 = vweird.f32 %v963
    %vm1112 = vweird.f32 %v1105
    %vm1113 = vmor %vm1111, %vm1112
    %v1114 = vsel %vm1113, %v1105, %v1110
    %v1115 = vrsqrt.pop %v964
    %v1116 = vmul.f32 %v1115, %v964
    %v1117 = vmul.f32 %v1116, %v1115
    %v1118 = vmul.f32 0.5, %v1117
    %v1119 = vsub.f32 1.5, %v1118
    %v1120 = vmul.f32 %v1115, %v1119
    %vm1121 = vweird.f32 %v964
    %vm1122 = vweird.f32 %v1115
    %vm1123 = vmor %vm1121, %vm1122
    %v1124 = vsel %vm1123, %v1115, %v1120
    %v1125 = vmul.f32 %v884, %v974
    %v1126 = vmul.f32 %v885, %v984
    %v1127 = vmul.f32 %v886, %v994
    %v1128 = vmul.f32 %v887, %v1004
    %v1129 = vmul.f32 %v888, %v1014
    %v1130 = vmul.f32 %v889, %v1024
    %v1131 = vmul.f32 %v890, %v1034
    %v1132 = vmul.f32 %v891, %v1044
    %v1133 = vmul.f32 %v892, %v1054
    %v1134 = vmul.f32 %v893, %v1064
    %v1135 = vmul.f32 %v894, %v1074
    %v1136 = vmul.f32 %v895, %v1084
    %v1137 = vmul.f32 %v896, %v1094
    %v1138 = vmul.f32 %v897, %v1104
    %v1139 = vmul.f32 %v898, %v1114
    %v1140 = vmul.f32 %v899, %v1124
    %v1141 = vstv %s900
    %v1142 = vmul.f32 %v1125, %v1141
    %v1143 = vmul.f32 %v1126, %v1141
    %v1144 = vmul.f32 %v1127, %v1141
    %v1145 = vmul.f32 %v1128, %v1141
    %v1146 = vmul.f32 %v1129, %v1141
    %v1147 = vmul.f32 %v1130, %v1141
    %v1148 = vmul.f32 %v1131, %v1141
    %v1149 = vmul.f32 %v1132, %v1141
    %v1150 = vmul.f32 %v1133, %v1141
    %v1151 = vmul.f32 %v1134, %v1141
    %v1152 = vmul.f32 %v1135, %v1141
    %v1153 = vmul.f32 %v1136, %v1141
    %v1154 = vmul.f32 %v1137, %v1141
    %v1155 = vmul.f32 %v1138, %v1141
    %v1156 = vmul.f32 %v1139, %v1141
    %v1157 = vmul.f32 %v1140, %v1141
    %v1158 = vpack.c.bf16 %v1143, %v1142
    %v1159 = vpack.c.bf16 %v1145, %v1144
    %v1160 = vpack.c.bf16 %v1147, %v1146
    %v1161 = vpack.c.bf16 %v1149, %v1148
    %v1162 = vpack.c.bf16 %v1151, %v1150
    %v1163 = vpack.c.bf16 %v1153, %v1152
    %v1164 = vpack.c.bf16 %v1155, %v1154
    %v1165 = vpack.c.bf16 %v1157, %v1156
    %v1166 = vpack.c.bf16 %v1126, %v1125
    %v1167 = vpack.c.bf16 %v1128, %v1127
    %v1168 = vpack.c.bf16 %v1130, %v1129
    %v1169 = vpack.c.bf16 %v1132, %v1131
    %v1170 = vpack.c.bf16 %v1134, %v1133
    %v1171 = vpack.c.bf16 %v1136, %v1135
    %v1172 = vpack.c.bf16 %v1138, %v1137
    %v1173 = vpack.c.bf16 %v1140, %v1139
    %1174 = vmatpush.bf16.xpose.msra.mxu0 %v1173
    %1175 = vmatpush.bf16.xpose.msra.mxu0 %v1172
    %1176 = vmatpush.bf16.xpose.msra.mxu0 %v1171
    %1177 = vmatpush.bf16.xpose.msra.mxu0 %v1170
    %1178 = vmatpush.bf16.xpose.msra.mxu0 %v1169
    %1179 = vmatpush.bf16.xpose.msra.mxu0 %v1168
    %1180 = vmatpush.bf16.xpose.msra.mxu0 %v1167
    %1181 = vmatpush.bf16.xpose.msra.mxu0 %v1166
    %1182 = vmatmul.bf16.gmra.mxu0 %v1158
    %v1183 = vpop.f32.mrf.mxu0
    %v1184 = vadd.f32 %v594, %v1183
    %v1185 = vpop.f32.mrf.mxu0
    %v1186 = vadd.f32 %v595, %v1185
    %1187 = vmatmul.bf16.gmra.mxu0 %v1159
    %v1188 = vpop.f32.mrf.mxu0
    %v1189 = vadd.f32 %v596, %v1188
    %v1190 = vpop.f32.mrf.mxu0
    %v1191 = vadd.f32 %v597, %v1190
    %1192 = vmatmul.bf16.gmra.mxu0 %v1160
    %v1193 = vpop.f32.mrf.mxu0
    %v1194 = vadd.f32 %v598, %v1193
    %v1195 = vpop.f32.mrf.mxu0
    %v1196 = vadd.f32 %v599, %v1195
    %1197 = vmatmul.bf16.gmra.mxu0 %v1161
    %v1198 = vpop.f32.mrf.mxu0
    %v1199 = vadd.f32 %v600, %v1198
    %v1200 = vpop.f32.mrf.mxu0
    %v1201 = vadd.f32 %v601, %v1200
    %1202 = vmatmul.bf16.gmra.mxu0 %v1162
    %v1203 = vpop.f32.mrf.mxu0
    %v1204 = vadd.f32 %v602, %v1203
    %v1205 = vpop.f32.mrf.mxu0
    %v1206 = vadd.f32 %v603, %v1205
    %1207 = vmatmul.bf16.gmra.mxu0 %v1163
    %v1208 = vpop.f32.mrf.mxu0
    %v1209 = vadd.f32 %v604, %v1208
    %v1210 = vpop.f32.mrf.mxu0
    %v1211 = vadd.f32 %v605, %v1210
    %1212 = vmatmul.bf16.gmra.mxu0 %v1164
    %v1213 = vpop.f32.mrf.mxu0
    %v1214 = vadd.f32 %v606, %v1213
    %v1215 = vpop.f32.mrf.mxu0
    %v1216 = vadd.f32 %v607, %v1215
    %1217 = vmatmul.bf16.gmra.mxu0 %v1165
    %v1218 = vpop.f32.mrf.mxu0
    %v1219 = vadd.f32 %v608, %v1218
    %v1220 = vpop.f32.mrf.mxu0
    %v1221 = vadd.f32 %v609, %v1220
    %1222 = vdwg.mxu0
    %1223 = vmax.xlane.f32.xlu0 %v1184
    %v1224 = vpop.xlane.xlu0 %1223
    %1225 = vmax.xlane.f32.xlu0 %v1186
    %v1226 = vpop.xlane.xlu0 %1225
    %1227 = vmax.xlane.f32.xlu0 %v1189
    %v1228 = vpop.xlane.xlu0 %1227
    %1229 = vmax.xlane.f32.xlu0 %v1191
    %v1230 = vpop.xlane.xlu0 %1229
    %1231 = vmax.xlane.f32.xlu0 %v1194
    %v1232 = vpop.xlane.xlu0 %1231
    %1233 = vmax.xlane.f32.xlu0 %v1196
    %v1234 = vpop.xlane.xlu0 %1233
    %1235 = vmax.xlane.f32.xlu0 %v1199
    %v1236 = vpop.xlane.xlu0 %1235
    %1237 = vmax.xlane.f32.xlu0 %v1201
    %v1238 = vpop.xlane.xlu0 %1237
    %1239 = vmax.xlane.f32.xlu0 %v1204
    %v1240 = vpop.xlane.xlu0 %1239
    %1241 = vmax.xlane.f32.xlu0 %v1206
    %v1242 = vpop.xlane.xlu0 %1241
    %1243 = vmax.xlane.f32.xlu0 %v1209
    %v1244 = vpop.xlane.xlu0 %1243
    %1245 = vmax.xlane.f32.xlu0 %v1211
    %v1246 = vpop.xlane.xlu0 %1245
    %1247 = vmax.xlane.f32.xlu0 %v1214
    %v1248 = vpop.xlane.xlu0 %1247
    %1249 = vmax.xlane.f32.xlu0 %v1216
    %v1250 = vpop.xlane.xlu0 %1249
    %1251 = vmax.xlane.f32.xlu0 %v1219
    %v1252 = vpop.xlane.xlu0 %1251
    %1253 = vmax.xlane.f32.xlu0 %v1221
    %v1254 = vpop.xlane.xlu0 %1253
    %v1255 = vsub.f32 %v1184, %v1224
    %v1256 = vsub.f32 %v1186, %v1226
    %v1257 = vsub.f32 %v1189, %v1228
    %v1258 = vsub.f32 %v1191, %v1230
    %v1259 = vsub.f32 %v1194, %v1232
    %v1260 = vsub.f32 %v1196, %v1234
    %v1261 = vsub.f32 %v1199, %v1236
    %v1262 = vsub.f32 %v1201, %v1238
    %v1263 = vsub.f32 %v1204, %v1240
    %v1264 = vsub.f32 %v1206, %v1242
    %v1265 = vsub.f32 %v1209, %v1244
    %v1266 = vsub.f32 %v1211, %v1246
    %v1267 = vsub.f32 %v1214, %v1248
    %v1268 = vsub.f32 %v1216, %v1250
    %v1269 = vsub.f32 %v1219, %v1252
    %v1270 = vsub.f32 %v1221, %v1254
    %v1271 = vmul.f32 %v1255, 1.442695
    %v1272 = vpow.pop %v1271
    %v1273 = vmul.f32 %v1256, 1.442695
    %v1274 = vpow.pop %v1273
    %v1275 = vmul.f32 %v1257, 1.442695
    %v1276 = vpow.pop %v1275
    %v1277 = vmul.f32 %v1258, 1.442695
    %v1278 = vpow.pop %v1277
    %v1279 = vmul.f32 %v1259, 1.442695
    %v1280 = vpow.pop %v1279
    %v1281 = vmul.f32 %v1260, 1.442695
    %v1282 = vpow.pop %v1281
    %v1283 = vmul.f32 %v1261, 1.442695
    %v1284 = vpow.pop %v1283
    %v1285 = vmul.f32 %v1262, 1.442695
    %v1286 = vpow.pop %v1285
    %v1287 = vmul.f32 %v1263, 1.442695
    %v1288 = vpow.pop %v1287
    %v1289 = vmul.f32 %v1264, 1.442695
    %v1290 = vpow.pop %v1289
    %v1291 = vmul.f32 %v1265, 1.442695
    %v1292 = vpow.pop %v1291
    %v1293 = vmul.f32 %v1266, 1.442695
    %v1294 = vpow.pop %v1293
    %v1295 = vmul.f32 %v1267, 1.442695
    %v1296 = vpow.pop %v1295
    %v1297 = vmul.f32 %v1268, 1.442695
    %v1298 = vpow.pop %v1297
    %v1299 = vmul.f32 %v1269, 1.442695
    %v1300 = vpow.pop %v1299
    %v1301 = vmul.f32 %v1270, 1.442695
    %v1302 = vpow.pop %v1301
    %1303 = vadd.xlane.f32.xlu0 %v1272
    %v1304 = vpop.xlane.xlu0 %1303
    %1305 = vadd.xlane.f32.xlu0 %v1274
    %v1306 = vpop.xlane.xlu0 %1305
    %1307 = vadd.xlane.f32.xlu0 %v1276
    %v1308 = vpop.xlane.xlu0 %1307
    %1309 = vadd.xlane.f32.xlu0 %v1278
    %v1310 = vpop.xlane.xlu0 %1309
    %1311 = vadd.xlane.f32.xlu0 %v1280
    %v1312 = vpop.xlane.xlu0 %1311
    %1313 = vadd.xlane.f32.xlu0 %v1282
    %v1314 = vpop.xlane.xlu0 %1313
    %1315 = vadd.xlane.f32.xlu0 %v1284
    %v1316 = vpop.xlane.xlu0 %1315
    %1317 = vadd.xlane.f32.xlu0 %v1286
    %v1318 = vpop.xlane.xlu0 %1317
    %1319 = vadd.xlane.f32.xlu0 %v1288
    %v1320 = vpop.xlane.xlu0 %1319
    %1321 = vadd.xlane.f32.xlu0 %v1290
    %v1322 = vpop.xlane.xlu0 %1321
    %1323 = vadd.xlane.f32.xlu0 %v1292
    %v1324 = vpop.xlane.xlu0 %1323
    %1325 = vadd.xlane.f32.xlu0 %v1294
    %v1326 = vpop.xlane.xlu0 %1325
    %1327 = vadd.xlane.f32.xlu0 %v1296
    %v1328 = vpop.xlane.xlu0 %1327
    %1329 = vadd.xlane.f32.xlu0 %v1298
    %v1330 = vpop.xlane.xlu0 %1329
    %1331 = vadd.xlane.f32.xlu0 %v1300
    %v1332 = vpop.xlane.xlu0 %1331
    %1333 = vadd.xlane.f32.xlu0 %v1302
    %v1334 = vpop.xlane.xlu0 %1333
    %v1335 = vmax.f32 %v1304, 1e-12
    %v1336 = vmax.f32 %v1306, 1e-12
    %v1337 = vmax.f32 %v1308, 1e-12
    %v1338 = vmax.f32 %v1310, 1e-12
    %v1339 = vmax.f32 %v1312, 1e-12
    %v1340 = vmax.f32 %v1314, 1e-12
    %v1341 = vmax.f32 %v1316, 1e-12
    %v1342 = vmax.f32 %v1318, 1e-12
    %v1343 = vmax.f32 %v1320, 1e-12
    %v1344 = vmax.f32 %v1322, 1e-12
    %v1345 = vmax.f32 %v1324, 1e-12
    %v1346 = vmax.f32 %v1326, 1e-12
    %v1347 = vmax.f32 %v1328, 1e-12
    %v1348 = vmax.f32 %v1330, 1e-12
    %v1349 = vmax.f32 %v1332, 1e-12
    %v1350 = vmax.f32 %v1334, 1e-12
    %v1351 = vrcp.pop %v1335
    %v1352 = vrcp.pop %v1336
    %v1353 = vrcp.pop %v1337
    %v1354 = vrcp.pop %v1338
    %v1355 = vrcp.pop %v1339
    %v1356 = vrcp.pop %v1340
    %v1357 = vrcp.pop %v1341
    %v1358 = vrcp.pop %v1342
    %v1359 = vrcp.pop %v1343
    %v1360 = vrcp.pop %v1344
    %v1361 = vrcp.pop %v1345
    %v1362 = vrcp.pop %v1346
    %v1363 = vrcp.pop %v1347
    %v1364 = vrcp.pop %v1348
    %v1365 = vrcp.pop %v1349
    %v1366 = vrcp.pop %v1350
    %v1367 = vmul.f32 %v1272, %v1351
    %v1368 = vmul.f32 %v1274, %v1352
    %v1369 = vmul.f32 %v1276, %v1353
    %v1370 = vmul.f32 %v1278, %v1354
    %v1371 = vmul.f32 %v1280, %v1355
    %v1372 = vmul.f32 %v1282, %v1356
    %v1373 = vmul.f32 %v1284, %v1357
    %v1374 = vmul.f32 %v1286, %v1358
    %v1375 = vmul.f32 %v1288, %v1359
    %v1376 = vmul.f32 %v1290, %v1360
    %v1377 = vmul.f32 %v1292, %v1361
    %v1378 = vmul.f32 %v1294, %v1362
    %v1379 = vmul.f32 %v1296, %v1363
    %v1380 = vmul.f32 %v1298, %v1364
    %v1381 = vmul.f32 %v1300, %v1365
    %v1382 = vmul.f32 %v1302, %v1366
    %v1383 = vpack.c.bf16 %v1368, %v1367
    %v1384 = vpack.c.bf16 %v1370, %v1369
    %v1385 = vpack.c.bf16 %v1372, %v1371
    %v1386 = vpack.c.bf16 %v1374, %v1373
    %v1387 = vpack.c.bf16 %v1376, %v1375
    %v1388 = vpack.c.bf16 %v1378, %v1377
    %v1389 = vpack.c.bf16 %v1380, %v1379
    %v1390 = vpack.c.bf16 %v1382, %v1381
    %v1391 = vpack.c.bf16 %v885, %v884
    %v1392 = vpack.c.bf16 %v887, %v886
    %v1393 = vpack.c.bf16 %v889, %v888
    %v1394 = vpack.c.bf16 %v891, %v890
    %v1395 = vpack.c.bf16 %v893, %v892
    %v1396 = vpack.c.bf16 %v895, %v894
    %v1397 = vpack.c.bf16 %v897, %v896
    %v1398 = vpack.c.bf16 %v899, %v898
    %1399 = vmatpush.bf16.msra.mxu0 %v1398
    %1400 = vmatpush.bf16.msra.mxu0 %v1397
    %1401 = vmatpush.bf16.msra.mxu0 %v1396
    %1402 = vmatpush.bf16.msra.mxu0 %v1395
    %1403 = vmatpush.bf16.msra.mxu0 %v1394
    %1404 = vmatpush.bf16.msra.mxu0 %v1393
    %1405 = vmatpush.bf16.msra.mxu0 %v1392
    %1406 = vmatpush.bf16.msra.mxu0 %v1391
    %1407 = vmatmul.bf16.gmra.mxu0 %v1383
    %v1408 = vpop.f32.mrf.mxu0
    %v1409 = vadd.f32 0.0, %v1408
    %v1410 = vpop.f32.mrf.mxu0
    %v1411 = vadd.f32 0.0, %v1410
    %1412 = vmatmul.bf16.gmra.mxu0 %v1384
    %v1413 = vpop.f32.mrf.mxu0
    %v1414 = vadd.f32 0.0, %v1413
    %v1415 = vpop.f32.mrf.mxu0
    %v1416 = vadd.f32 0.0, %v1415
    %1417 = vmatmul.bf16.gmra.mxu0 %v1385
    %v1418 = vpop.f32.mrf.mxu0
    %v1419 = vadd.f32 0.0, %v1418
    %v1420 = vpop.f32.mrf.mxu0
    %v1421 = vadd.f32 0.0, %v1420
    %1422 = vmatmul.bf16.gmra.mxu0 %v1386
    %v1423 = vpop.f32.mrf.mxu0
    %v1424 = vadd.f32 0.0, %v1423
    %v1425 = vpop.f32.mrf.mxu0
    %v1426 = vadd.f32 0.0, %v1425
    %1427 = vmatmul.bf16.gmra.mxu0 %v1387
    %v1428 = vpop.f32.mrf.mxu0
    %v1429 = vadd.f32 0.0, %v1428
    %v1430 = vpop.f32.mrf.mxu0
    %v1431 = vadd.f32 0.0, %v1430
    %1432 = vmatmul.bf16.gmra.mxu0 %v1388
    %v1433 = vpop.f32.mrf.mxu0
    %v1434 = vadd.f32 0.0, %v1433
    %v1435 = vpop.f32.mrf.mxu0
    %v1436 = vadd.f32 0.0, %v1435
    %1437 = vmatmul.bf16.gmra.mxu0 %v1389
    %v1438 = vpop.f32.mrf.mxu0
    %v1439 = vadd.f32 0.0, %v1438
    %v1440 = vpop.f32.mrf.mxu0
    %v1441 = vadd.f32 0.0, %v1440
    %1442 = vmatmul.bf16.gmra.mxu0 %v1390
    %v1443 = vpop.f32.mrf.mxu0
    %v1444 = vadd.f32 0.0, %v1443
    %v1445 = vpop.f32.mrf.mxu0
    %v1446 = vadd.f32 0.0, %v1445
    %1447 = vdwg.mxu0
    %v1448 = vmax.f32 %v1409, 0.0
    %v1449 = vmax.f32 %v1411, 0.0
    %v1450 = vmax.f32 %v1414, 0.0
    %v1451 = vmax.f32 %v1416, 0.0
    %v1452 = vmax.f32 %v1419, 0.0
    %v1453 = vmax.f32 %v1421, 0.0
    %v1454 = vmax.f32 %v1424, 0.0
    %v1455 = vmax.f32 %v1426, 0.0
    %v1456 = vmax.f32 %v1429, 0.0
    %v1457 = vmax.f32 %v1431, 0.0
    %v1458 = vmax.f32 %v1434, 0.0
    %v1459 = vmax.f32 %v1436, 0.0
    %v1460 = vmax.f32 %v1439, 0.0
    %v1461 = vmax.f32 %v1441, 0.0
    %v1462 = vmax.f32 %v1444, 0.0
    %v1463 = vmax.f32 %v1446, 0.0
    %v1464 = vpack.c.bf16 %v1449, %v1448
    %v1465 = vpack.c.bf16 %v1451, %v1450
    %v1466 = vpack.c.bf16 %v1453, %v1452
    %v1467 = vpack.c.bf16 %v1455, %v1454
    %v1468 = vpack.c.bf16 %v1457, %v1456
    %v1469 = vpack.c.bf16 %v1459, %v1458
    %v1470 = vpack.c.bf16 %v1461, %v1460
    %v1471 = vpack.c.bf16 %v1463, %v1462
    %v1472 = vld [vmem:[#allocation11] sm:$0xf]
    %v1473 = vld [vmem:[#allocation11 + $0x4] sm:$0xf]
    %v1474 = vld [vmem:[#allocation11 + $0x8] sm:$0xf]
    %v1475 = vld [vmem:[#allocation11 + $0xc] sm:$0xf]
    %v1476 = vld [vmem:[#allocation11 + $0x10] sm:$0xf]
    %v1477 = vld [vmem:[#allocation11 + $0x14] sm:$0xf]
    %v1478 = vld [vmem:[#allocation11 + $0x18] sm:$0xf]
    %v1479 = vld [vmem:[#allocation11 + $0x1c] sm:$0xf]
    %v1480 = vld [vmem:[#allocation11 + $0x20] sm:$0xf]
    %v1481 = vld [vmem:[#allocation11 + $0x24] sm:$0xf]
    %v1482 = vld [vmem:[#allocation11 + $0x28] sm:$0xf]
    %v1483 = vld [vmem:[#allocation11 + $0x2c] sm:$0xf]
    %v1484 = vld [vmem:[#allocation11 + $0x30] sm:$0xf]
    %v1485 = vld [vmem:[#allocation11 + $0x34] sm:$0xf]
    %v1486 = vld [vmem:[#allocation11 + $0x38] sm:$0xf]
    %v1487 = vld [vmem:[#allocation11 + $0x3c] sm:$0xf]
    %v1488 = vld [vmem:[%s6] sm:$0x1]
    %v1489 = vunpack.c.l.bf16 %v1488
    %v1490 = vperm.slane %v1489, 0
    %v1507 = vunpack.c.l.b16 %v1472
    %v1508 = vunpack.c.l.b16 %v1473
    %v1509 = vunpack.c.l.b16 %v1474
    %v1510 = vunpack.c.l.b16 %v1475
    %v1511 = vunpack.c.l.b16 %v1476
    %v1512 = vunpack.c.l.b16 %v1477
    %v1513 = vunpack.c.l.b16 %v1478
    %v1514 = vunpack.c.l.b16 %v1479
    %v1515 = vunpack.c.l.b16 %v1480
    %v1516 = vunpack.c.l.b16 %v1481
    %v1517 = vunpack.c.l.b16 %v1482
    %v1518 = vunpack.c.l.b16 %v1483
    %v1519 = vunpack.c.l.b16 %v1484
    %v1520 = vunpack.c.l.b16 %v1485
    %v1521 = vunpack.c.l.b16 %v1486
    %v1522 = vunpack.c.l.b16 %v1487
    %v1523 = vpack.c.b16 %v1508, %v1507
    %v1524 = vpack.c.b16 %v1510, %v1509
    %v1525 = vpack.c.b16 %v1512, %v1511
    %v1526 = vpack.c.b16 %v1514, %v1513
    %v1527 = vpack.c.b16 %v1516, %v1515
    %v1528 = vpack.c.b16 %v1518, %v1517
    %v1529 = vpack.c.b16 %v1520, %v1519
    %v1530 = vpack.c.b16 %v1522, %v1521
    %1539 = vmatpush.bf16.msra.mxu0 %v1530
    %1540 = vmatpush.bf16.msra.mxu0 %v1529
    %1541 = vmatpush.bf16.msra.mxu0 %v1528
    %1542 = vmatpush.bf16.msra.mxu0 %v1527
    %1543 = vmatpush.bf16.msra.mxu0 %v1526
    %1544 = vmatpush.bf16.msra.mxu0 %v1525
    %1545 = vmatpush.bf16.msra.mxu0 %v1524
    %1546 = vmatpush.bf16.msra.mxu0 %v1523
    %1547 = vmatmul.bf16.gmra.mxu0 %v1464
    %v1548 = vpop.f32.mrf.mxu0
    %v1549 = vadd.f32 %v1490, %v1548
    %v1550 = vpop.f32.mrf.mxu0
    %v1551 = vadd.f32 %v1490, %v1550
    %1552 = vmatmul.bf16.gmra.mxu0 %v1465
    %v1553 = vpop.f32.mrf.mxu0
    %v1554 = vadd.f32 %v1490, %v1553
    %v1555 = vpop.f32.mrf.mxu0
    %v1556 = vadd.f32 %v1490, %v1555
    %1557 = vmatmul.bf16.gmra.mxu0 %v1466
    %v1558 = vpop.f32.mrf.mxu0
    %v1559 = vadd.f32 %v1490, %v1558
    %v1560 = vpop.f32.mrf.mxu0
    %v1561 = vadd.f32 %v1490, %v1560
    %1562 = vmatmul.bf16.gmra.mxu0 %v1467
    %v1563 = vpop.f32.mrf.mxu0
    %v1564 = vadd.f32 %v1490, %v1563
    %v1565 = vpop.f32.mrf.mxu0
    %v1566 = vadd.f32 %v1490, %v1565
    %1567 = vmatmul.bf16.gmra.mxu0 %v1468
    %v1568 = vpop.f32.mrf.mxu0
    %v1569 = vadd.f32 %v1490, %v1568
    %v1570 = vpop.f32.mrf.mxu0
    %v1571 = vadd.f32 %v1490, %v1570
    %1572 = vmatmul.bf16.gmra.mxu0 %v1469
    %v1573 = vpop.f32.mrf.mxu0
    %v1574 = vadd.f32 %v1490, %v1573
    %v1575 = vpop.f32.mrf.mxu0
    %v1576 = vadd.f32 %v1490, %v1575
    %1577 = vmatmul.bf16.gmra.mxu0 %v1470
    %v1578 = vpop.f32.mrf.mxu0
    %v1579 = vadd.f32 %v1490, %v1578
    %v1580 = vpop.f32.mrf.mxu0
    %v1581 = vadd.f32 %v1490, %v1580
    %1582 = vmatmul.bf16.gmra.mxu0 %v1471
    %v1583 = vpop.f32.mrf.mxu0
    %v1584 = vadd.f32 %v1490, %v1583
    %v1585 = vpop.f32.mrf.mxu0
    %v1586 = vadd.f32 %v1490, %v1585
    %1587 = vdwg.mxu0
    %v1588 = vlaneseq
    %v1589 = vand.u32 %v1588, 127
    %vm1590 = vcmp.lt.s32.totalorder %v1589, 16
    %v1591 = vsel %vm1590, %v1549, -1e+30
    %v1592 = vsel %vm1590, %v1551, -1e+30
    %v1593 = vsel %vm1590, %v1554, -1e+30
    %v1594 = vsel %vm1590, %v1556, -1e+30
    %v1595 = vsel %vm1590, %v1559, -1e+30
    %v1596 = vsel %vm1590, %v1561, -1e+30
    %v1597 = vsel %vm1590, %v1564, -1e+30
    %v1598 = vsel %vm1590, %v1566, -1e+30
    %v1599 = vsel %vm1590, %v1569, -1e+30
    %v1600 = vsel %vm1590, %v1571, -1e+30
    %v1601 = vsel %vm1590, %v1574, -1e+30
    %v1602 = vsel %vm1590, %v1576, -1e+30
    %v1603 = vsel %vm1590, %v1579, -1e+30
    %v1604 = vsel %vm1590, %v1581, -1e+30
    %v1605 = vsel %vm1590, %v1584, -1e+30
    %v1606 = vsel %vm1590, %v1586, -1e+30
    %1607 = vmax.xlane.f32.xlu0 %v1591
    %v1608 = vpop.xlane.xlu0 %1607
    %1609 = vmax.xlane.f32.xlu0 %v1592
    %v1610 = vpop.xlane.xlu0 %1609
    %1611 = vmax.xlane.f32.xlu0 %v1593
    %v1612 = vpop.xlane.xlu0 %1611
    %1613 = vmax.xlane.f32.xlu0 %v1594
    %v1614 = vpop.xlane.xlu0 %1613
    %1615 = vmax.xlane.f32.xlu0 %v1595
    %v1616 = vpop.xlane.xlu0 %1615
    %1617 = vmax.xlane.f32.xlu0 %v1596
    %v1618 = vpop.xlane.xlu0 %1617
    %1619 = vmax.xlane.f32.xlu0 %v1597
    %v1620 = vpop.xlane.xlu0 %1619
    %1621 = vmax.xlane.f32.xlu0 %v1598
    %v1622 = vpop.xlane.xlu0 %1621
    %1623 = vmax.xlane.f32.xlu0 %v1599
    %v1624 = vpop.xlane.xlu0 %1623
    %1625 = vmax.xlane.f32.xlu0 %v1600
    %v1626 = vpop.xlane.xlu0 %1625
    %1627 = vmax.xlane.f32.xlu0 %v1601
    %v1628 = vpop.xlane.xlu0 %1627
    %1629 = vmax.xlane.f32.xlu0 %v1602
    %v1630 = vpop.xlane.xlu0 %1629
    %1631 = vmax.xlane.f32.xlu0 %v1603
    %v1632 = vpop.xlane.xlu0 %1631
    %1633 = vmax.xlane.f32.xlu0 %v1604
    %v1634 = vpop.xlane.xlu0 %1633
    %1635 = vmax.xlane.f32.xlu0 %v1605
    %v1636 = vpop.xlane.xlu0 %1635
    %1637 = vmax.xlane.f32.xlu0 %v1606
    %v1638 = vpop.xlane.xlu0 %1637
    %v1639 = vsub.f32 %v1591, %v1608
    %v1640 = vsub.f32 %v1592, %v1610
    %v1641 = vsub.f32 %v1593, %v1612
    %v1642 = vsub.f32 %v1594, %v1614
    %v1643 = vsub.f32 %v1595, %v1616
    %v1644 = vsub.f32 %v1596, %v1618
    %v1645 = vsub.f32 %v1597, %v1620
    %v1646 = vsub.f32 %v1598, %v1622
    %v1647 = vsub.f32 %v1599, %v1624
    %v1648 = vsub.f32 %v1600, %v1626
    %v1649 = vsub.f32 %v1601, %v1628
    %v1650 = vsub.f32 %v1602, %v1630
    %v1651 = vsub.f32 %v1603, %v1632
    %v1652 = vsub.f32 %v1604, %v1634
    %v1653 = vsub.f32 %v1605, %v1636
    %v1654 = vsub.f32 %v1606, %v1638
    %v1655 = vmul.f32 %v1639, 1.442695
    %v1656 = vpow.pop %v1655
    %v1657 = vmul.f32 %v1640, 1.442695
    %v1658 = vpow.pop %v1657
    %v1659 = vmul.f32 %v1641, 1.442695
    %v1660 = vpow.pop %v1659
    %v1661 = vmul.f32 %v1642, 1.442695
    %v1662 = vpow.pop %v1661
    %v1663 = vmul.f32 %v1643, 1.442695
    %v1664 = vpow.pop %v1663
    %v1665 = vmul.f32 %v1644, 1.442695
    %v1666 = vpow.pop %v1665
    %v1667 = vmul.f32 %v1645, 1.442695
    %v1668 = vpow.pop %v1667
    %v1669 = vmul.f32 %v1646, 1.442695
    %v1670 = vpow.pop %v1669
    %v1671 = vmul.f32 %v1647, 1.442695
    %v1672 = vpow.pop %v1671
    %v1673 = vmul.f32 %v1648, 1.442695
    %v1674 = vpow.pop %v1673
    %v1675 = vmul.f32 %v1649, 1.442695
    %v1676 = vpow.pop %v1675
    %v1677 = vmul.f32 %v1650, 1.442695
    %v1678 = vpow.pop %v1677
    %v1679 = vmul.f32 %v1651, 1.442695
    %v1680 = vpow.pop %v1679
    %v1681 = vmul.f32 %v1652, 1.442695
    %v1682 = vpow.pop %v1681
    %v1683 = vmul.f32 %v1653, 1.442695
    %v1684 = vpow.pop %v1683
    %v1685 = vmul.f32 %v1654, 1.442695
    %v1686 = vpow.pop %v1685
    %1687 = vadd.xlane.f32.xlu0 %v1656
    %v1688 = vpop.xlane.xlu0 %1687
    %1689 = vadd.xlane.f32.xlu0 %v1658
    %v1690 = vpop.xlane.xlu0 %1689
    %1691 = vadd.xlane.f32.xlu0 %v1660
    %v1692 = vpop.xlane.xlu0 %1691
    %1693 = vadd.xlane.f32.xlu0 %v1662
    %v1694 = vpop.xlane.xlu0 %1693
    %1695 = vadd.xlane.f32.xlu0 %v1664
    %v1696 = vpop.xlane.xlu0 %1695
    %1697 = vadd.xlane.f32.xlu0 %v1666
    %v1698 = vpop.xlane.xlu0 %1697
    %1699 = vadd.xlane.f32.xlu0 %v1668
    %v1700 = vpop.xlane.xlu0 %1699
    %1701 = vadd.xlane.f32.xlu0 %v1670
    %v1702 = vpop.xlane.xlu0 %1701
    %1703 = vadd.xlane.f32.xlu0 %v1672
    %v1704 = vpop.xlane.xlu0 %1703
    %1705 = vadd.xlane.f32.xlu0 %v1674
    %v1706 = vpop.xlane.xlu0 %1705
    %1707 = vadd.xlane.f32.xlu0 %v1676
    %v1708 = vpop.xlane.xlu0 %1707
    %1709 = vadd.xlane.f32.xlu0 %v1678
    %v1710 = vpop.xlane.xlu0 %1709
    %1711 = vadd.xlane.f32.xlu0 %v1680
    %v1712 = vpop.xlane.xlu0 %1711
    %1713 = vadd.xlane.f32.xlu0 %v1682
    %v1714 = vpop.xlane.xlu0 %1713
    %1715 = vadd.xlane.f32.xlu0 %v1684
    %v1716 = vpop.xlane.xlu0 %1715
    %1717 = vadd.xlane.f32.xlu0 %v1686
    %v1718 = vpop.xlane.xlu0 %1717
    %v1719 = vlog2.pop %v1688
    %v1720 = vmul.f32 %v1719, 0.6931472
    %v1721 = vlog2.pop %v1690
    %v1722 = vmul.f32 %v1721, 0.6931472
    %v1723 = vlog2.pop %v1692
    %v1724 = vmul.f32 %v1723, 0.6931472
    %v1725 = vlog2.pop %v1694
    %v1726 = vmul.f32 %v1725, 0.6931472
    %v1727 = vlog2.pop %v1696
    %v1728 = vmul.f32 %v1727, 0.6931472
    %v1729 = vlog2.pop %v1698
    %v1730 = vmul.f32 %v1729, 0.6931472
    %v1731 = vlog2.pop %v1700
    %v1732 = vmul.f32 %v1731, 0.6931472
    %v1733 = vlog2.pop %v1702
    %v1734 = vmul.f32 %v1733, 0.6931472
    %v1735 = vlog2.pop %v1704
    %v1736 = vmul.f32 %v1735, 0.6931472
    %v1737 = vlog2.pop %v1706
    %v1738 = vmul.f32 %v1737, 0.6931472
    %v1739 = vlog2.pop %v1708
    %v1740 = vmul.f32 %v1739, 0.6931472
    %v1741 = vlog2.pop %v1710
    %v1742 = vmul.f32 %v1741, 0.6931472
    %v1743 = vlog2.pop %v1712
    %v1744 = vmul.f32 %v1743, 0.6931472
    %v1745 = vlog2.pop %v1714
    %v1746 = vmul.f32 %v1745, 0.6931472
    %v1747 = vlog2.pop %v1716
    %v1748 = vmul.f32 %v1747, 0.6931472
    %v1749 = vlog2.pop %v1718
    %v1750 = vmul.f32 %v1749, 0.6931472
    %v1751 = vsub.f32 %v1639, %v1720
    %v1752 = vsub.f32 %v1640, %v1722
    %v1753 = vsub.f32 %v1641, %v1724
    %v1754 = vsub.f32 %v1642, %v1726
    %v1755 = vsub.f32 %v1643, %v1728
    %v1756 = vsub.f32 %v1644, %v1730
    %v1757 = vsub.f32 %v1645, %v1732
    %v1758 = vsub.f32 %v1646, %v1734
    %v1759 = vsub.f32 %v1647, %v1736
    %v1760 = vsub.f32 %v1648, %v1738
    %v1761 = vsub.f32 %v1649, %v1740
    %v1762 = vsub.f32 %v1650, %v1742
    %v1763 = vsub.f32 %v1651, %v1744
    %v1764 = vsub.f32 %v1652, %v1746
    %v1765 = vsub.f32 %v1653, %v1748
    %v1766 = vsub.f32 %v1654, %v1750
    %v1767 = vpack.c.bf16 %v1751, %v1751
    %v1768 = vpack.c.bf16 %v1752, %v1752
    %v1769 = vpack.c.bf16 %v1753, %v1753
    %v1770 = vpack.c.bf16 %v1754, %v1754
    %v1771 = vpack.c.bf16 %v1755, %v1755
    %v1772 = vpack.c.bf16 %v1756, %v1756
    %v1773 = vpack.c.bf16 %v1757, %v1757
    %v1774 = vpack.c.bf16 %v1758, %v1758
    %v1775 = vpack.c.bf16 %v1759, %v1759
    %v1776 = vpack.c.bf16 %v1760, %v1760
    %v1777 = vpack.c.bf16 %v1761, %v1761
    %v1778 = vpack.c.bf16 %v1762, %v1762
    %v1779 = vpack.c.bf16 %v1763, %v1763
    %v1780 = vpack.c.bf16 %v1764, %v1764
    %v1781 = vpack.c.bf16 %v1765, %v1765
    %v1782 = vpack.c.bf16 %v1766, %v1766
    %1783 = vst [vmem:[%s7] sm:$0xf] %v1767
    %1784 = vst [vmem:[%s7 + $0x4] sm:$0xf] %v1768
    %1785 = vst [vmem:[%s7 + $0x8] sm:$0xf] %v1769
    %1786 = vst [vmem:[%s7 + $0xc] sm:$0xf] %v1770
    %1787 = vst [vmem:[%s7 + $0x10] sm:$0xf] %v1771
    %1788 = vst [vmem:[%s7 + $0x14] sm:$0xf] %v1772
    %1789 = vst [vmem:[%s7 + $0x18] sm:$0xf] %v1773
    %1790 = vst [vmem:[%s7 + $0x1c] sm:$0xf] %v1774
    %1791 = vst [vmem:[%s7 + $0x20] sm:$0xf] %v1775
    %1792 = vst [vmem:[%s7 + $0x24] sm:$0xf] %v1776
    %1793 = vst [vmem:[%s7 + $0x28] sm:$0xf] %v1777
    %1794 = vst [vmem:[%s7 + $0x2c] sm:$0xf] %v1778
    %1795 = vst [vmem:[%s7 + $0x30] sm:$0xf] %v1779
    %1796 = vst [vmem:[%s7 + $0x34] sm:$0xf] %v1780
    %1797 = vst [vmem:[%s7 + $0x38] sm:$0xf] %v1781
    %1798 = vst [vmem:[%s7 + $0x3c] sm:$0xf] %v1782
    // Predicated region
    $region46: #{net_forward.1} parent=1 // pred_check
      _
    $region47: #{net_forward.1} parent=1 // pred_check_branch
      %1800 = sbr.rel (0) target = $region49
    $region48: #{net_forward.1} parent=1 // pred_region
      _
    $region49: #{net_forward.1} parent=1 // pred_fallthru
      _
    // Predicated region
    $region50: #{net_forward.1} parent=1 // pred_check
      _
    $region51: #{net_forward.1} parent=1 // pred_check_branch
      %1802 = sbr.rel (0) target = $region53
    $region52: #{net_forward.1} parent=1 // pred_region
      _
    $region53: #{net_forward.1} parent=1 // pred_fallthru
      _
    %1803 = vsyncpa [#allocation5], 1
    %1804 = vsyncpa [#allocation7], 1
    %1805 = vsyncpa [#allocation10], 1

</llo_original>
